<compile_context>
chip_gen: v7x
topology: tpu7x:2x2x1
jax: 0.10.0
libtpu: 0.0.40
codegen_flags: <defaults>
</compile_context>

<pallas_src>
import functools

import jax
import jax.numpy as jnp
from jax import lax
from jax.experimental import pallas as pl
from jax.experimental.pallas import tpu as pltpu

EPS = 1e-5
_DEF_TILE_M = 512                 # matmul rows per grid step (multiple of 16)
_ELEM_TILE_BYTES = 2 << 20        # ~2 MiB per input block for elementwise passes
_VMEM_LIMIT = 48 * 1024 * 1024    # explicit scoped-VMEM budget (< v7x 64 MiB)


def _round_up(x, m):
    return (x + m - 1) // m * m


def _params():
    # Single grid axis over independent row tiles -> "parallel" (megacore /
    # v7x dual-TC friendly); explicit VMEM budget per review.
    return pltpu.CompilerParams(dimension_semantics=("parallel",),
                                vmem_limit_bytes=_VMEM_LIMIT)


# ----------------------------- Pallas kernels ------------------------------
def _matmul_stats_kernel(p_ref, w_ref, y_ref, s1_ref, s2_ref):
    """One M-tile of the im2col conv matmul (bf16 in, f32 accumulate).
    Stores the pre-BN output in bf16 plus f32 per-channel (sum, sum_sq)
    partials as plain full-block stores (no concat/reshape relayout)."""
    y = jnp.dot(p_ref[...], w_ref[...], preferred_element_type=jnp.float32)
    y_ref[...] = y.astype(y_ref.dtype)
    s1_ref[...] = jnp.sum(y, axis=0, keepdims=True)[None]          # [1,1,C]
    s2_ref[...] = jnp.sum(y * y, axis=0, keepdims=True)[None]      # [1,1,C]


def _bn_relu_kernel(y_ref, sc_ref, sh_ref, o_ref):
    """Folded BatchNorm (single FMA) + ReLU on one lane-dense tile."""
    o_ref[...] = jnp.maximum(
        y_ref[...].astype(jnp.float32) * sc_ref[...] + sh_ref[...], 0.0
    ).astype(o_ref.dtype)


def _make_final_kernel(bn_shortcut):
    """Folded BN2 + ReLU + (optionally BN'd) shortcut add + final ReLU."""
    def kernel(y2_ref, s2_ref, h2_ref, sc_ref, *rest):
        if bn_shortcut:
            ss_ref, hs_ref, o_ref = rest
            shortcut = sc_ref[...].astype(jnp.float32) * ss_ref[...] + hs_ref[...]
        else:
            (o_ref,) = rest
            shortcut = sc_ref[...].astype(jnp.float32)
        y = jnp.maximum(
            y2_ref[...].astype(jnp.float32) * s2_ref[...] + h2_ref[...], 0.0)
        o_ref[...] = jnp.maximum(y + shortcut, 0.0).astype(o_ref.dtype)
    return kernel


_K_FINAL_BN_SC = _make_final_kernel(True)    # downsample: conv+BN shortcut
_K_FINAL_ID_SC = _make_final_kernel(False)   # identity shortcut


# ---------------------------- pallas_call wrappers ---------------------------
def _conv_matmul_stats(patches_bf16, w_bf16, tile_m):
    """Tiled [M,K]@[K,C] matmul; returns pre-BN conv output (bf16) and the
    per-channel f32 (sum, sum_sq) reduced over all real rows."""
    m, k = patches_bf16.shape
    c = w_bf16.shape[1]
    nt = m // tile_m
    cost = pl.CostEstimate(
        flops=2 * m * k * c,
        transcendentals=0,
        bytes_accessed=m * k * 2 + k * c * 2 + m * c * 2 + 2 * nt * c * 4)
    y, p1, p2 = pl.pallas_call(
        _matmul_stats_kernel,
        out_shape=(jax.ShapeDtypeStruct((m, c), jnp.bfloat16),
                   jax.ShapeDtypeStruct((nt, 1, c), jnp.float32),
                   jax.ShapeDtypeStruct((nt, 1, c), jnp.float32)),
        grid=(nt,),
        in_specs=[pl.BlockSpec((tile_m, k), lambda i: (i, 0)),
                  pl.BlockSpec((k, c), lambda i: (0, 0))],
        out_specs=(pl.BlockSpec((tile_m, c), lambda i: (i, 0)),
                   pl.BlockSpec((1, 1, c), lambda i: (i, 0, 0)),
                   pl.BlockSpec((1, 1, c), lambda i: (i, 0, 0))),
        compiler_params=_params(),
        cost_estimate=cost,
    )(patches_bf16, w_bf16)
    return y, jnp.sum(p1, axis=(0, 1)), jnp.sum(p2, axis=(0, 1))


def _bn_fold(s, ss, count, gamma, beta):
    """Fold training-mode BN into one FMA: y*scale + shift (conv bias cancels)."""
    mean = s / count
    var = jnp.maximum(ss / count - mean * mean, 0.0)   # clamp E[x^2]-E[x]^2
    scale = gamma * lax.rsqrt(var + EPS)
    shift = beta - mean * scale
    return (scale.reshape(1, -1).astype(jnp.float32),
            shift.reshape(1, -1).astype(jnp.float32))


def _elem_layout(m, c):
    """Lane-dense [rows, cols] view of an [m, c] activation plus the row-tile
    size for the elementwise passes (large, ~2 MiB, lane-dense blocks)."""
    if c % 128 == 0:
        rows, cols, fold = m, c, 1
    elif c < 128 and 128 % c == 0 and (m * c) % 128 == 0:
        rows, cols, fold = m * c // 128, 128, 128 // c
    else:
        rows, cols, fold = m, c, 1          # fallback: lane-masked stores
    tile = rows
    while (tile * cols * 4 > _ELEM_TILE_BYTES
           and tile % 2 == 0 and (tile // 2) % 16 == 0):
        tile //= 2
    return rows, cols, fold, tile


def _bn_relu(y, scale, shift, out_dtype):
    m, c = y.shape
    rows, cols, fold, tile = _elem_layout(m, c)
    nt = rows // tile
    row = pl.BlockSpec((tile, cols), lambda i: (i, 0))
    vec = pl.BlockSpec((1, cols), lambda i: (0, 0))
    out = pl.pallas_call(
        _bn_relu_kernel,
        out_shape=jax.ShapeDtypeStruct((rows, cols), out_dtype),
        grid=(nt,),
        in_specs=[row, vec, vec],
        out_specs=row,
        compiler_params=_params(),
    )(y.reshape(rows, cols), jnp.tile(scale, (1, fold)), jnp.tile(shift, (1, fold)))
    return out.reshape(m, c)


def _final_fused(y2, scale2, shift2, shortcut, scale_s=None, shift_s=None):
    m, c = y2.shape
    rows, cols, fold, tile = _elem_layout(m, c)
    nt = rows // tile
    row = pl.BlockSpec((tile, cols), lambda i: (i, 0))
    vec = pl.BlockSpec((1, cols), lambda i: (0, 0))
    t = lambda v: jnp.tile(v, (1, fold))
    y2r = y2.reshape(rows, cols)
    scr = shortcut.reshape(rows, cols)
    if scale_s is not None:
        kernel = _K_FINAL_BN_SC
        inputs = (y2r, t(scale2), t(shift2), scr, t(scale_s), t(shift_s))
        in_specs = [row, vec, vec, row, vec, vec]
    else:
        kernel = _K_FINAL_ID_SC
        inputs = (y2r, t(scale2), t(shift2), scr)
        in_specs = [row, vec, vec, row]
    out = pl.pallas_call(
        kernel,
        out_shape=jax.ShapeDtypeStruct((rows, cols), jnp.float32),
        grid=(nt,),
        in_specs=in_specs,
        out_specs=row,
        compiler_params=_params(),
    )(*inputs)
    return out.reshape(m, c)


# ------------------------------ XLA glue -------------------------------------
def _im2col(x_nhwc, ksize, stride, pad):
    """Patch extraction (XLA glue, bf16). Returns [N*Ho*Wo, k*k*C]."""
    n, h, w, c = x_nhwc.shape
    xp = jnp.pad(x_nhwc, ((0, 0), (pad, pad), (pad, pad), (0, 0)))
    ho = (h + 2 * pad - ksize) // stride + 1
    wo = (w + 2 * pad - ksize) // stride + 1
    taps = []
    for kh in range(ksize):
        for kw in range(ksize):
            taps.append(xp[:, kh:kh + stride * ho:stride,
                           kw:kw + stride * wo:stride, :])
    patches = jnp.stack(taps, axis=-2)        # [N, Ho, Wo, k*k, C]
    return patches.reshape(n * ho * wo, ksize * ksize * c)


def res_block_forward(x_nchw, params, downsample, tile_m=None):
    """Pallas implementation of ResBlock.forward (NCHW in, NCHW out)."""
    x = jnp.transpose(x_nchw, (0, 2, 3, 1)).astype(jnp.float32)       # NHWC
    x_bf = x.astype(jnp.bfloat16)                 # bf16 feeds the MXU
    n, h, w, cin = x.shape
    cout = params["w1"].shape[-1]

    stride1 = 2 if downsample else 1
    ho = (h + 2 - 3) // stride1 + 1
    wo = (w + 2 - 3) // stride1 + 1
    m = n * ho * wo

    if tile_m is None:
        tile_m = min(_DEF_TILE_M, _round_up(m, 16))
    assert tile_m % 16 == 0, "tile_m must be a multiple of 16 (bf16 sublanes)"
    m_pad = _round_up(m, tile_m)

    def pad_rows(a):
        if a.shape[0] == m_pad:
            return a
        return jnp.pad(a, ((0, m_pad - a.shape[0]), (0, 0)))

    # ---- conv1 matmul + BN1 stats (pass 1) ---------------------------------
    p1 = _im2col(x_bf, 3, stride1, 1)
    y1, s1, q1 = _conv_matmul_stats(
        pad_rows(p1), params["w1"].reshape(-1, cout).astype(jnp.bfloat16), tile_m)
    sc1, sh1 = _bn_fold(s1, q1, m, params["g1"], params["be1"])
    # BN1 + ReLU (pass 2); stored bf16 since it is the conv2 MXU operand.
    out1 = _bn_relu(y1, sc1, sh1, jnp.bfloat16)

    # ---- shortcut branch ----------------------------------------------------
    if downsample:
        # 1x1 stride-2 conv == channel matmul on the subsampled pixels.
        ps = x_bf[:, ::2, ::2, :].reshape(m, cin)
        ys, ss_, qs = _conv_matmul_stats(
            pad_rows(ps), params["ws"].reshape(cin, cout).astype(jnp.bfloat16), tile_m)
        sc_s, sh_s = _bn_fold(ss_, qs, m, params["gs"], params["bes"])
        shortcut = ys                                  # pre-BN, bf16
    else:
        assert cin == cout, "identity shortcut requires in_channels == out_channels"
        shortcut = pad_rows(x_bf.reshape(m, cin))      # identity, bf16
        sc_s = sh_s = None

    # ---- conv2 matmul + BN2 stats (pass 1) ---------------------------------
    p2 = _im2col(out1[:m].reshape(n, ho, wo, cout), 3, 1, 1)
    y2, s2, q2 = _conv_matmul_stats(
        pad_rows(p2), params["w2"].reshape(-1, cout).astype(jnp.bfloat16), tile_m)
    sc2, sh2 = _bn_fold(s2, q2, m, params["g2"], params["be2"])

    # ---- fused BN2 + ReLU + shortcut(-BN) add + final ReLU (pass 2) --------
    out = _final_fused(y2, sc2, sh2, shortcut, sc_s, sh_s)
    out = out[:m].reshape(n, ho, wo, cout)
    return jnp.transpose(out, (0, 3, 1, 2))            # back to NCHW


# --------------------------- pure-JAX reference ------------------------------
def _ref_conv(x_nhwc, w_hwio, b, stride, pad):
    # Matches the kernels' precision choice: bf16 MXU inputs, f32 accumulation.
    y = lax.conv_general_dilated(
        x_nhwc.astype(jnp.bfloat16), w_hwio.astype(jnp.bfloat16),
        (stride, stride), [(pad, pad), (pad, pad)],
        dimension_numbers=("NHWC", "HWIO", "NHWC"),
        preferred_element_type=jnp.float32)
    # Conv bias kept here; it cancels exactly under training-mode BN below,
    # which is why the Pallas kernels drop it.
    return y + b.reshape(1, 1, 1, -1)


def _ref_bn(y, g, be):
    mean = jnp.mean(y, axis=(0, 1, 2), keepdims=True)
    var = jnp.mean(jnp.square(y - mean), axis=(0, 1, 2), keepdims=True)
    return ((y - mean) * lax.rsqrt(var + EPS) * g.reshape(1, 1, 1, -1)
            + be.reshape(1, 1, 1, -1))


def ref_forward(x_nchw, params, downsample):
    x = jnp.transpose(x_nchw, (0, 2, 3, 1)).astype(jnp.float32)
    stride1 = 2 if downsample else 1
    if downsample:
        sc = _ref_bn(_ref_conv(x, params["ws"], params["bs"], 2, 0),
                     params["gs"], params["bes"])
    else:
        sc = x
    y = jnp.maximum(_ref_bn(_ref_conv(x, params["w1"], params["b1"], stride1, 1),
                            params["g1"], params["be1"]), 0.0)
    y = jnp.maximum(_ref_bn(_ref_conv(y, params["w2"], params["b2"], 1, 1),
                            params["g2"], params["be2"]), 0.0)
    y = jnp.maximum(y + sc, 0.0)
    return jnp.transpose(y, (0, 3, 1, 2))


# ------------------------------ params init ----------------------------------
def init_params(key, cin, cout, downsample):
    ks = jax.random.split(key, 12)

    def nrm(k, shape, scale):
        return scale * jax.random.normal(k, shape, jnp.float32)

    p = {
        "w1": nrm(ks[0], (3, 3, cin, cout), 0.1),
        "b1": nrm(ks[1], (cout,), 0.1),
        "w2": nrm(ks[2], (3, 3, cout, cout), 0.1),
        "b2": nrm(ks[3], (cout,), 0.1),
        "g1": 1.0 + nrm(ks[4], (cout,), 0.1),
        "be1": nrm(ks[5], (cout,), 0.1),
        "g2": 1.0 + nrm(ks[6], (cout,), 0.1),
        "be2": nrm(ks[7], (cout,), 0.1),
    }
    if downsample:
        p.update({
            "ws": nrm(ks[8], (1, 1, cin, cout), 0.1),
            "bs": nrm(ks[9], (cout,), 0.1),
            "gs": 1.0 + nrm(ks[10], (cout,), 0.1),
            "bes": nrm(ks[11], (cout,), 0.1),
        })
    return p


if __name__ == "__main__":
    key = jax.random.PRNGKey(0)
    k_x1, k_p1, k_x2, k_p2 = jax.random.split(key, 4)
    # bf16 intermediates (y1/y2/shortcut stored bf16) -> tolerance for a
    # bf16-rounded pipeline; structural bugs would be O(1) off.
    ATOL = RTOL = 2e-2

    # Case 1: downsample=True (4 -> 8 channels, spatial 16 -> 8); auto tile,
    # whole pipeline under jit.
    x1 = jax.random.normal(k_x1, (2, 4, 16, 16), jnp.float32)
    p1 = init_params(k_p1, 4, 8, True)
    fwd1 = jax.jit(functools.partial(res_block_forward, downsample=True))
    out1 = jax.block_until_ready(fwd1(x1, p1))
    ref1 = ref_forward(x1, p1, True)
    assert out1.shape == (2, 8, 8, 8), out1.shape
    assert jnp.allclose(out1, ref1, atol=ATOL, rtol=RTOL), \
        float(jnp.max(jnp.abs(out1 - ref1)))

    # Case 2: downsample=False (identity shortcut). Small tile_m so the
    # multi-tile matmul grid + cross-tile BN statistics path is exercised
    # (M = 2*16*16 = 512 -> 4 grid steps on the matmul pass).
    x2 = jax.random.normal(k_x2, (2, 8, 16, 16), jnp.float32)
    p2 = init_params(k_p2, 8, 8, False)
    out2 = jax.block_until_ready(res_block_forward(x2, p2, False, tile_m=128))
    ref2 = ref_forward(x2, p2, False)
    assert out2.shape == (2, 8, 16, 16), out2.shape
    assert jnp.allclose(out2, ref2, atol=ATOL, rtol=RTOL), \
        float(jnp.max(jnp.abs(out2 - ref2)))

    print("KERNEL_OK")
</pallas_src>

<mosaic_0001>
module attributes {stable_mosaic.version = 11 : i64} {
  func.func @_matmul_stats_kernel(%arg0: i32, %arg1: memref<128x4xbf16, #tpu.memory_space<vmem>>, %arg2: memref<4x8xbf16, #tpu.memory_space<vmem>>, %arg3: memref<128x8xbf16, #tpu.memory_space<vmem>>, %arg4: memref<1x1x8xf32, #tpu.memory_space<vmem>>, %arg5: memref<1x1x8xf32, #tpu.memory_space<vmem>>) attributes {dimension_semantics = [#tpu.dimension_semantics<parallel>], iteration_bounds = array<i64: 1>, scalar_prefetch = 0 : i64, scratch_operands = 0 : i64, tpu.core_type = #tpu.core_type<tc>, window_params = [{transform_indices = @transform_0, window_bounds = array<i64: 128, 4>}, {pipeline_mode = #tpu.pipeline_mode<synchronous>, transform_indices = @transform_1, window_bounds = array<i64: 4, 8>}, {transform_indices = @transform_2, window_bounds = array<i64: 128, 8>}, {transform_indices = @transform_3, window_bounds = array<i64: 1, 1, 8>}, {transform_indices = @transform_4, window_bounds = array<i64: 1, 1, 8>}]} {
    %c0 = arith.constant 0 : index
    %c0_0 = arith.constant 0 : index
    %0 = vector.load %arg1[%c0, %c0_0] : memref<128x4xbf16, #tpu.memory_space<vmem>>, vector<128x4xbf16>
    %c0_1 = arith.constant 0 : index
    %c0_2 = arith.constant 0 : index
    %1 = vector.load %arg2[%c0_1, %c0_2] : memref<4x8xbf16, #tpu.memory_space<vmem>>, vector<4x8xbf16>
    %cst = arith.constant dense<0.000000e+00> : vector<128x8xf32>
    %2 = tpu.matmul %0, %1, %cst {dimension_numbers = #tpu.dot_dimension_numbers<[1], [0], [0], [1], [0, 0, 1, 1], [], []>} : vector<128x4xbf16>, vector<4x8xbf16>, vector<128x8xf32> -> vector<128x8xf32>
    %3 = arith.truncf %2 : vector<128x8xf32> to vector<128x8xbf16>
    %c0_3 = arith.constant 0 : index
    %c0_4 = arith.constant 0 : index
    %4 = vector.load %arg3[%c0_3, %c0_4] : memref<128x8xbf16, #tpu.memory_space<vmem>>, vector<128x8xbf16>
    tpu.vector_store %arg3[%c0_3, %c0_4], %3 {strides = array<i32>} : memref<128x8xbf16, #tpu.memory_space<vmem>>, vector<128x8xbf16>,
    %cst_5 = arith.constant dense<0.000000e+00> : vector<8xf32>
    %5 = vector.multi_reduction <add>, %2, %cst_5 [0] : vector<128x8xf32> to vector<8xf32>
    %6 = vector.shape_cast %5 : vector<8xf32> to vector<1x8xf32>
    %7 = vector.shape_cast %6 : vector<1x8xf32> to vector<1x1x8xf32>
    %c0_6 = arith.constant 0 : index
    %c0_7 = arith.constant 0 : index
    %c0_8 = arith.constant 0 : index
    %8 = vector.load %arg4[%c0_6, %c0_7, %c0_8] : memref<1x1x8xf32, #tpu.memory_space<vmem>>, vector<1x1x8xf32>
    tpu.vector_store %arg4[%c0_6, %c0_7, %c0_8], %7 {strides = array<i32>} : memref<1x1x8xf32, #tpu.memory_space<vmem>>, vector<1x1x8xf32>,
    %9 = arith.mulf %2, %2 : vector<128x8xf32>
    %cst_9 = arith.constant dense<0.000000e+00> : vector<8xf32>
    %10 = vector.multi_reduction <add>, %9, %cst_9 [0] : vector<128x8xf32> to vector<8xf32>
    %11 = vector.shape_cast %10 : vector<8xf32> to vector<1x8xf32>
    %12 = vector.shape_cast %11 : vector<1x8xf32> to vector<1x1x8xf32>
    %c0_10 = arith.constant 0 : index
    %c0_11 = arith.constant 0 : index
    %c0_12 = arith.constant 0 : index
    %13 = vector.load %arg5[%c0_10, %c0_11, %c0_12] : memref<1x1x8xf32, #tpu.memory_space<vmem>>, vector<1x1x8xf32>
    tpu.vector_store %arg5[%c0_10, %c0_11, %c0_12], %12 {strides = array<i32>} : memref<1x1x8xf32, #tpu.memory_space<vmem>>, vector<1x1x8xf32>,
    return
  }
  func.func @transform_0(%arg0: i32) -> (i32, i32) {
    %c0_i32 = arith.constant 0 : i32
    %c0_i32_0 = arith.constant 0 : i32
    return %arg0, %c0_i32 : i32, i32
  }
  func.func @transform_1(%arg0: i32) -> (i32, i32) {
    %c0_i32 = arith.constant 0 : i32
    %c0_i32_0 = arith.constant 0 : i32
    %c0_i32_1 = arith.constant 0 : i32
    return %c0_i32, %c0_i32_0 : i32, i32
  }
  func.func @transform_2(%arg0: i32) -> (i32, i32) {
    %c0_i32 = arith.constant 0 : i32
    %c0_i32_0 = arith.constant 0 : i32
    return %arg0, %c0_i32 : i32, i32
  }
  func.func @transform_3(%arg0: i32) -> (i32, i32, i32) {
    %c0_i32 = arith.constant 0 : i32
    %c0_i32_0 = arith.constant 0 : i32
    %c0_i32_1 = arith.constant 0 : i32
    return %arg0, %c0_i32, %c0_i32_0 : i32, i32, i32
  }
  func.func @transform_4(%arg0: i32) -> (i32, i32, i32) {
    %c0_i32 = arith.constant 0 : i32
    %c0_i32_0 = arith.constant 0 : i32
    %c0_i32_1 = arith.constant 0 : i32
    return %arg0, %c0_i32, %c0_i32_0 : i32, i32, i32
  }
}

module attributes {stable_mosaic.version = 11 : i64} {
  func.func @_bn_relu_kernel(%arg0: i32, %arg1: memref<8x128xbf16, #tpu.memory_space<vmem>>, %arg2: memref<1x128xf32, #tpu.memory_space<vmem>>, %arg3: memref<1x128xf32, #tpu.memory_space<vmem>>, %arg4: memref<8x128xbf16, #tpu.memory_space<vmem>>) attributes {dimension_semantics = [#tpu.dimension_semantics<parallel>], iteration_bounds = array<i64: 1>, scalar_prefetch = 0 : i64, scratch_operands = 0 : i64, tpu.core_type = #tpu.core_type<tc>, window_params = [{transform_indices = @transform_0, window_bounds = array<i64: 8, 128>}, {pipeline_mode = #tpu.pipeline_mode<synchronous>, transform_indices = @transform_1, window_bounds = array<i64: 1, 128>}, {pipeline_mode = #tpu.pipeline_mode<synchronous>, transform_indices = @transform_2, window_bounds = array<i64: 1, 128>}, {transform_indices = @transform_3, window_bounds = array<i64: 8, 128>}]} {
    %c0 = arith.constant 0 : index
    %c0_0 = arith.constant 0 : index
    %0 = vector.load %arg1[%c0, %c0_0] : memref<8x128xbf16, #tpu.memory_space<vmem>>, vector<8x128xbf16>
    %1 = arith.extf %0 : vector<8x128xbf16> to vector<8x128xf32>
    %c0_1 = arith.constant 0 : index
    %c0_2 = arith.constant 0 : index
    %2 = vector.load %arg2[%c0_1, %c0_2] : memref<1x128xf32, #tpu.memory_space<vmem>>, vector<1x128xf32>
    %3 = vector.broadcast %2 : vector<1x128xf32> to vector<8x128xf32>
    %4 = arith.mulf %1, %3 : vector<8x128xf32>
    %c0_3 = arith.constant 0 : index
    %c0_4 = arith.constant 0 : index
    %5 = vector.load %arg3[%c0_3, %c0_4] : memref<1x128xf32, #tpu.memory_space<vmem>>, vector<1x128xf32>
    %6 = vector.broadcast %5 : vector<1x128xf32> to vector<8x128xf32>
    %7 = arith.addf %4, %6 : vector<8x128xf32>
    %cst = arith.constant 0.000000e+00 : f32
    %8 = vector.broadcast %cst : f32 to vector<8x128xf32>
    %9 = arith.maximumf %7, %8 : vector<8x128xf32>
    %10 = arith.truncf %9 : vector<8x128xf32> to vector<8x128xbf16>
    %c0_5 = arith.constant 0 : index
    %c0_6 = arith.constant 0 : index
    %11 = vector.load %arg4[%c0_5, %c0_6] : memref<8x128xbf16, #tpu.memory_space<vmem>>, vector<8x128xbf16>
    tpu.vector_store %arg4[%c0_5, %c0_6], %10 {strides = array<i32>} : memref<8x128xbf16, #tpu.memory_space<vmem>>, vector<8x128xbf16>,
    return
  }
  func.func @transform_0(%arg0: i32) -> (i32, i32) {
    %c0_i32 = arith.constant 0 : i32
    %c0_i32_0 = arith.constant 0 : i32
    return %arg0, %c0_i32 : i32, i32
  }
  func.func @transform_1(%arg0: i32) -> (i32, i32) {
    %c0_i32 = arith.constant 0 : i32
    %c0_i32_0 = arith.constant 0 : i32
    %c0_i32_1 = arith.constant 0 : i32
    return %c0_i32, %c0_i32_0 : i32, i32
  }
  func.func @transform_2(%arg0: i32) -> (i32, i32) {
    %c0_i32 = arith.constant 0 : i32
    %c0_i32_0 = arith.constant 0 : i32
    %c0_i32_1 = arith.constant 0 : i32
    return %c0_i32, %c0_i32_0 : i32, i32
  }
  func.func @transform_3(%arg0: i32) -> (i32, i32) {
    %c0_i32 = arith.constant 0 : i32
    %c0_i32_0 = arith.constant 0 : i32
    return %arg0, %c0_i32 : i32, i32
  }
}

module attributes {stable_mosaic.version = 11 : i64} {
  func.func @_matmul_stats_kernel(%arg0: i32, %arg1: memref<128x36xbf16, #tpu.memory_space<vmem>>, %arg2: memref<36x8xbf16, #tpu.memory_space<vmem>>, %arg3: memref<128x8xbf16, #tpu.memory_space<vmem>>, %arg4: memref<1x1x8xf32, #tpu.memory_space<vmem>>, %arg5: memref<1x1x8xf32, #tpu.memory_space<vmem>>) attributes {dimension_semantics = [#tpu.dimension_semantics<parallel>], iteration_bounds = array<i64: 1>, scalar_prefetch = 0 : i64, scratch_operands = 0 : i64, tpu.core_type = #tpu.core_type<tc>, window_params = [{transform_indices = @transform_0, window_bounds = array<i64: 128, 36>}, {pipeline_mode = #tpu.pipeline_mode<synchronous>, transform_indices = @transform_1, window_bounds = array<i64: 36, 8>}, {transform_indices = @transform_2, window_bounds = array<i64: 128, 8>}, {transform_indices = @transform_3, window_bounds = array<i64: 1, 1, 8>}, {transform_indices = @transform_4, window_bounds = array<i64: 1, 1, 8>}]} {
    %c0 = arith.constant 0 : index
    %c0_0 = arith.constant 0 : index
    %0 = vector.load %arg1[%c0, %c0_0] : memref<128x36xbf16, #tpu.memory_space<vmem>>, vector<128x36xbf16>
    %c0_1 = arith.constant 0 : index
    %c0_2 = arith.constant 0 : index
    %1 = vector.load %arg2[%c0_1, %c0_2] : memref<36x8xbf16, #tpu.memory_space<vmem>>, vector<36x8xbf16>
    %cst = arith.constant dense<0.000000e+00> : vector<128x8xf32>
    %2 = tpu.matmul %0, %1, %cst {dimension_numbers = #tpu.dot_dimension_numbers<[1], [0], [0], [1], [0, 0, 1, 1], [], []>} : vector<128x36xbf16>, vector<36x8xbf16>, vector<128x8xf32> -> vector<128x8xf32>
    %3 = arith.truncf %2 : vector<128x8xf32> to vector<128x8xbf16>
    %c0_3 = arith.constant 0 : index
    %c0_4 = arith.constant 0 : index
    %4 = vector.load %arg3[%c0_3, %c0_4] : memref<128x8xbf16, #tpu.memory_space<vmem>>, vector<128x8xbf16>
    tpu.vector_store %arg3[%c0_3, %c0_4], %3 {strides = array<i32>} : memref<128x8xbf16, #tpu.memory_space<vmem>>, vector<128x8xbf16>,
    %cst_5 = arith.constant dense<0.000000e+00> : vector<8xf32>
    %5 = vector.multi_reduction <add>, %2, %cst_5 [0] : vector<128x8xf32> to vector<8xf32>
    %6 = vector.shape_cast %5 : vector<8xf32> to vector<1x8xf32>
    %7 = vector.shape_cast %6 : vector<1x8xf32> to vector<1x1x8xf32>
    %c0_6 = arith.constant 0 : index
    %c0_7 = arith.constant 0 : index
    %c0_8 = arith.constant 0 : index
    %8 = vector.load %arg4[%c0_6, %c0_7, %c0_8] : memref<1x1x8xf32, #tpu.memory_space<vmem>>, vector<1x1x8xf32>
    tpu.vector_store %arg4[%c0_6, %c0_7, %c0_8], %7 {strides = array<i32>} : memref<1x1x8xf32, #tpu.memory_space<vmem>>, vector<1x1x8xf32>,
    %9 = arith.mulf %2, %2 : vector<128x8xf32>
    %cst_9 = arith.constant dense<0.000000e+00> : vector<8xf32>
    %10 = vector.multi_reduction <add>, %9, %cst_9 [0] : vector<128x8xf32> to vector<8xf32>
    %11 = vector.shape_cast %10 : vector<8xf32> to vector<1x8xf32>
    %12 = vector.shape_cast %11 : vector<1x8xf32> to vector<1x1x8xf32>
    %c0_10 = arith.constant 0 : index
    %c0_11 = arith.constant 0 : index
    %c0_12 = arith.constant 0 : index
    %13 = vector.load %arg5[%c0_10, %c0_11, %c0_12] : memref<1x1x8xf32, #tpu.memory_space<vmem>>, vector<1x1x8xf32>
    tpu.vector_store %arg5[%c0_10, %c0_11, %c0_12], %12 {strides = array<i32>} : memref<1x1x8xf32, #tpu.memory_space<vmem>>, vector<1x1x8xf32>,
    return
  }
  func.func @transform_0(%arg0: i32) -> (i32, i32) {
    %c0_i32 = arith.constant 0 : i32
    %c0_i32_0 = arith.constant 0 : i32
    return %arg0, %c0_i32 : i32, i32
  }
  func.func @transform_1(%arg0: i32) -> (i32, i32) {
    %c0_i32 = arith.constant 0 : i32
    %c0_i32_0 = arith.constant 0 : i32
    %c0_i32_1 = arith.constant 0 : i32
    return %c0_i32, %c0_i32_0 : i32, i32
  }
  func.func @transform_2(%arg0: i32) -> (i32, i32) {
    %c0_i32 = arith.constant 0 : i32
    %c0_i32_0 = arith.constant 0 : i32
    return %arg0, %c0_i32 : i32, i32
  }
  func.func @transform_3(%arg0: i32) -> (i32, i32, i32) {
    %c0_i32 = arith.constant 0 : i32
    %c0_i32_0 = arith.constant 0 : i32
    %c0_i32_1 = arith.constant 0 : i32
    return %arg0, %c0_i32, %c0_i32_0 : i32, i32, i32
  }
  func.func @transform_4(%arg0: i32) -> (i32, i32, i32) {
    %c0_i32 = arith.constant 0 : i32
    %c0_i32_0 = arith.constant 0 : i32
    %c0_i32_1 = arith.constant 0 : i32
    return %arg0, %c0_i32, %c0_i32_0 : i32, i32, i32
  }
}

module attributes {stable_mosaic.version = 11 : i64} {
  func.func @_matmul_stats_kernel(%arg0: i32, %arg1: memref<128x72xbf16, #tpu.memory_space<vmem>>, %arg2: memref<72x8xbf16, #tpu.memory_space<vmem>>, %arg3: memref<128x8xbf16, #tpu.memory_space<vmem>>, %arg4: memref<1x1x8xf32, #tpu.memory_space<vmem>>, %arg5: memref<1x1x8xf32, #tpu.memory_space<vmem>>) attributes {dimension_semantics = [#tpu.dimension_semantics<parallel>], iteration_bounds = array<i64: 1>, scalar_prefetch = 0 : i64, scratch_operands = 0 : i64, tpu.core_type = #tpu.core_type<tc>, window_params = [{transform_indices = @transform_0, window_bounds = array<i64: 128, 72>}, {pipeline_mode = #tpu.pipeline_mode<synchronous>, transform_indices = @transform_1, window_bounds = array<i64: 72, 8>}, {transform_indices = @transform_2, window_bounds = array<i64: 128, 8>}, {transform_indices = @transform_3, window_bounds = array<i64: 1, 1, 8>}, {transform_indices = @transform_4, window_bounds = array<i64: 1, 1, 8>}]} {
    %c0 = arith.constant 0 : index
    %c0_0 = arith.constant 0 : index
    %0 = vector.load %arg1[%c0, %c0_0] : memref<128x72xbf16, #tpu.memory_space<vmem>>, vector<128x72xbf16>
    %c0_1 = arith.constant 0 : index
    %c0_2 = arith.constant 0 : index
    %1 = vector.load %arg2[%c0_1, %c0_2] : memref<72x8xbf16, #tpu.memory_space<vmem>>, vector<72x8xbf16>
    %cst = arith.constant dense<0.000000e+00> : vector<128x8xf32>
    %2 = tpu.matmul %0, %1, %cst {dimension_numbers = #tpu.dot_dimension_numbers<[1], [0], [0], [1], [0, 0, 1, 1], [], []>} : vector<128x72xbf16>, vector<72x8xbf16>, vector<128x8xf32> -> vector<128x8xf32>
    %3 = arith.truncf %2 : vector<128x8xf32> to vector<128x8xbf16>
    %c0_3 = arith.constant 0 : index
    %c0_4 = arith.constant 0 : index
    %4 = vector.load %arg3[%c0_3, %c0_4] : memref<128x8xbf16, #tpu.memory_space<vmem>>, vector<128x8xbf16>
    tpu.vector_store %arg3[%c0_3, %c0_4], %3 {strides = array<i32>} : memref<128x8xbf16, #tpu.memory_space<vmem>>, vector<128x8xbf16>,
    %cst_5 = arith.constant dense<0.000000e+00> : vector<8xf32>
    %5 = vector.multi_reduction <add>, %2, %cst_5 [0] : vector<128x8xf32> to vector<8xf32>
    %6 = vector.shape_cast %5 : vector<8xf32> to vector<1x8xf32>
    %7 = vector.shape_cast %6 : vector<1x8xf32> to vector<1x1x8xf32>
    %c0_6 = arith.constant 0 : index
    %c0_7 = arith.constant 0 : index
    %c0_8 = arith.constant 0 : index
    %8 = vector.load %arg4[%c0_6, %c0_7, %c0_8] : memref<1x1x8xf32, #tpu.memory_space<vmem>>, vector<1x1x8xf32>
    tpu.vector_store %arg4[%c0_6, %c0_7, %c0_8], %7 {strides = array<i32>} : memref<1x1x8xf32, #tpu.memory_space<vmem>>, vector<1x1x8xf32>,
    %9 = arith.mulf %2, %2 : vector<128x8xf32>
    %cst_9 = arith.constant dense<0.000000e+00> : vector<8xf32>
    %10 = vector.multi_reduction <add>, %9, %cst_9 [0] : vector<128x8xf32> to vector<8xf32>
    %11 = vector.shape_cast %10 : vector<8xf32> to vector<1x8xf32>
    %12 = vector.shape_cast %11 : vector<1x8xf32> to vector<1x1x8xf32>
    %c0_10 = arith.constant 0 : index
    %c0_11 = arith.constant 0 : index
    %c0_12 = arith.constant 0 : index
    %13 = vector.load %arg5[%c0_10, %c0_11, %c0_12] : memref<1x1x8xf32, #tpu.memory_space<vmem>>, vector<1x1x8xf32>
    tpu.vector_store %arg5[%c0_10, %c0_11, %c0_12], %12 {strides = array<i32>} : memref<1x1x8xf32, #tpu.memory_space<vmem>>, vector<1x1x8xf32>,
    return
  }
  func.func @transform_0(%arg0: i32) -> (i32, i32) {
    %c0_i32 = arith.constant 0 : i32
    %c0_i32_0 = arith.constant 0 : i32
    return %arg0, %c0_i32 : i32, i32
  }
  func.func @transform_1(%arg0: i32) -> (i32, i32) {
    %c0_i32 = arith.constant 0 : i32
    %c0_i32_0 = arith.constant 0 : i32
    %c0_i32_1 = arith.constant 0 : i32
    return %c0_i32, %c0_i32_0 : i32, i32
  }
  func.func @transform_2(%arg0: i32) -> (i32, i32) {
    %c0_i32 = arith.constant 0 : i32
    %c0_i32_0 = arith.constant 0 : i32
    return %arg0, %c0_i32 : i32, i32
  }
  func.func @transform_3(%arg0: i32) -> (i32, i32, i32) {
    %c0_i32 = arith.constant 0 : i32
    %c0_i32_0 = arith.constant 0 : i32
    %c0_i32_1 = arith.constant 0 : i32
    return %arg0, %c0_i32, %c0_i32_0 : i32, i32, i32
  }
  func.func @transform_4(%arg0: i32) -> (i32, i32, i32) {
    %c0_i32 = arith.constant 0 : i32
    %c0_i32_0 = arith.constant 0 : i32
    %c0_i32_1 = arith.constant 0 : i32
    return %arg0, %c0_i32, %c0_i32_0 : i32, i32, i32
  }
}

module attributes {stable_mosaic.version = 11 : i64} {
  func.func @kernel(%arg0: i32, %arg1: memref<8x128xbf16, #tpu.memory_space<vmem>>, %arg2: memref<1x128xf32, #tpu.memory_space<vmem>>, %arg3: memref<1x128xf32, #tpu.memory_space<vmem>>, %arg4: memref<8x128xbf16, #tpu.memory_space<vmem>>, %arg5: memref<1x128xf32, #tpu.memory_space<vmem>>, %arg6: memref<1x128xf32, #tpu.memory_space<vmem>>, %arg7: memref<8x128xf32, #tpu.memory_space<vmem>>) attributes {dimension_semantics = [#tpu.dimension_semantics<parallel>], iteration_bounds = array<i64: 1>, scalar_prefetch = 0 : i64, scratch_operands = 0 : i64, tpu.core_type = #tpu.core_type<tc>, window_params = [{transform_indices = @transform_0, window_bounds = array<i64: 8, 128>}, {pipeline_mode = #tpu.pipeline_mode<synchronous>, transform_indices = @transform_1, window_bounds = array<i64: 1, 128>}, {pipeline_mode = #tpu.pipeline_mode<synchronous>, transform_indices = @transform_2, window_bounds = array<i64: 1, 128>}, {transform_indices = @transform_3, window_bounds = array<i64: 8, 128>}, {pipeline_mode = #tpu.pipeline_mode<synchronous>, transform_indices = @transform_4, window_bounds = array<i64: 1, 128>}, {pipeline_mode = #tpu.pipeline_mode<synchronous>, transform_indices = @transform_5, window_bounds = array<i64: 1, 128>}, {transform_indices = @transform_6, window_bounds = array<i64: 8, 128>}]} {
    %c0 = arith.constant 0 : index
    %c0_0 = arith.constant 0 : index
    %0 = vector.load %arg4[%c0, %c0_0] : memref<8x128xbf16, #tpu.memory_space<vmem>>, vector<8x128xbf16>
    %1 = arith.extf %0 : vector<8x128xbf16> to vector<8x128xf32>
    %c0_1 = arith.constant 0 : index
    %c0_2 = arith.constant 0 : index
    %2 = vector.load %arg5[%c0_1, %c0_2] : memref<1x128xf32, #tpu.memory_space<vmem>>, vector<1x128xf32>
    %3 = vector.broadcast %2 : vector<1x128xf32> to vector<8x128xf32>
    %4 = arith.mulf %1, %3 : vector<8x128xf32>
    %c0_3 = arith.constant 0 : index
    %c0_4 = arith.constant 0 : index
    %5 = vector.load %arg6[%c0_3, %c0_4] : memref<1x128xf32, #tpu.memory_space<vmem>>, vector<1x128xf32>
    %6 = vector.broadcast %5 : vector<1x128xf32> to vector<8x128xf32>
    %7 = arith.addf %4, %6 : vector<8x128xf32>
    %c0_5 = arith.constant 0 : index
    %c0_6 = arith.constant 0 : index
    %8 = vector.load %arg1[%c0_5, %c0_6] : memref<8x128xbf16, #tpu.memory_space<vmem>>, vector<8x128xbf16>
    %9 = arith.extf %8 : vector<8x128xbf16> to vector<8x128xf32>
    %c0_7 = arith.constant 0 : index
    %c0_8 = arith.constant 0 : index
    %10 = vector.load %arg2[%c0_7, %c0_8] : memref<1x128xf32, #tpu.memory_space<vmem>>, vector<1x128xf32>
    %11 = vector.broadcast %10 : vector<1x128xf32> to vector<8x128xf32>
    %12 = arith.mulf %9, %11 : vector<8x128xf32>
    %c0_9 = arith.constant 0 : index
    %c0_10 = arith.constant 0 : index
    %13 = vector.load %arg3[%c0_9, %c0_10] : memref<1x128xf32, #tpu.memory_space<vmem>>, vector<1x128xf32>
    %14 = vector.broadcast %13 : vector<1x128xf32> to vector<8x128xf32>
    %15 = arith.addf %12, %14 : vector<8x128xf32>
    %cst = arith.constant 0.000000e+00 : f32
    %16 = vector.broadcast %cst : f32 to vector<8x128xf32>
    %17 = arith.maximumf %15, %16 : vector<8x128xf32>
    %18 = arith.addf %17, %7 : vector<8x128xf32>
    %cst_11 = arith.constant 0.000000e+00 : f32
    %19 = vector.broadcast %cst_11 : f32 to vector<8x128xf32>
    %20 = arith.maximumf %18, %19 : vector<8x128xf32>
    %c0_12 = arith.constant 0 : index
    %c0_13 = arith.constant 0 : index
    %21 = vector.load %arg7[%c0_12, %c0_13] : memref<8x128xf32, #tpu.memory_space<vmem>>, vector<8x128xf32>
    tpu.vector_store %arg7[%c0_12, %c0_13], %20 {strides = array<i32>} : memref<8x128xf32, #tpu.memory_space<vmem>>, vector<8x128xf32>,
    return
  }
  func.func @transform_0(%arg0: i32) -> (i32, i32) {
    %c0_i32 = arith.constant 0 : i32
    %c0_i32_0 = arith.constant 0 : i32
    return %arg0, %c0_i32 : i32, i32
  }
  func.func @transform_1(%arg0: i32) -> (i32, i32) {
    %c0_i32 = arith.constant 0 : i32
    %c0_i32_0 = arith.constant 0 : i32
    %c0_i32_1 = arith.constant 0 : i32
    return %c0_i32, %c0_i32_0 : i32, i32
  }
  func.func @transform_2(%arg0: i32) -> (i32, i32) {
    %c0_i32 = arith.constant 0 : i32
    %c0_i32_0 = arith.constant 0 : i32
    %c0_i32_1 = arith.constant 0 : i32
    return %c0_i32, %c0_i32_0 : i32, i32
  }
  func.func @transform_3(%arg0: i32) -> (i32, i32) {
    %c0_i32 = arith.constant 0 : i32
    %c0_i32_0 = arith.constant 0 : i32
    return %arg0, %c0_i32 : i32, i32
  }
  func.func @transform_4(%arg0: i32) -> (i32, i32) {
    %c0_i32 = arith.constant 0 : i32
    %c0_i32_0 = arith.constant 0 : i32
    %c0_i32_1 = arith.constant 0 : i32
    return %c0_i32, %c0_i32_0 : i32, i32
  }
  func.func @transform_5(%arg0: i32) -> (i32, i32) {
    %c0_i32 = arith.constant 0 : i32
    %c0_i32_0 = arith.constant 0 : i32
    %c0_i32_1 = arith.constant 0 : i32
    return %c0_i32, %c0_i32_0 : i32, i32
  }
  func.func @transform_6(%arg0: i32) -> (i32, i32) {
    %c0_i32 = arith.constant 0 : i32
    %c0_i32_0 = arith.constant 0 : i32
    return %arg0, %c0_i32 : i32, i32
  }
}

</mosaic_0001>

<llo_original>
// kernel: res_block_forward.6
$region0: #{res_block_forward.6}
  #allocation0 [shape = 'u32[]', space=smem, size = 0x4, offset = 0x4, fixed_abs, tag = 'smem constant byte address 0x4 - core index']
  #allocation1 [shape = 'u32[144,128]{1,0:T(1,128)}', space=vmem, size = 0x12000, scoped, tag = 'internal scratch']
  %s0 = inlined_call_operand.vmem [shape: bf16[8,128], index: 0, kind: input, shape index: {}]
  %s1 = inlined_call_operand.vmem [shape: f32[1,128], index: 1, kind: input, shape index: {}]
  %s2 = inlined_call_operand.vmem [shape: f32[1,128], index: 2, kind: input, shape index: {}]
  %s3 = inlined_call_operand.vmem [shape: bf16[8,128], index: 3, kind: output, shape index: {}]
  %s4 = sld [smem:[#allocation0]]
  $region22: #{res_block_forward.6} parent=0
    _
  %s6 = ssub.s32 1, %s4
  %s7 = scalar_select 0, %s6, %s4
  // Predicated region
  $region2: #{res_block_forward.6} parent=0 // pred_check
    _
  $region3: #{res_block_forward.6} parent=0 // pred_check_branch
    %9 = sbr.rel (0) target = $region5
  $region4: #{res_block_forward.6} parent=0 // pred_region
    _
  $region5: #{res_block_forward.6} parent=0 // pred_fallthru
    _
  // Predicated region
  $region6: #{res_block_forward.6} parent=0 // pred_check
    _
  $region7: #{res_block_forward.6} parent=0 // pred_check_branch
    %11 = sbr.rel (0) target = $region9
  $region8: #{res_block_forward.6} parent=0 // pred_region
    _
  $region9: #{res_block_forward.6} parent=0 // pred_fallthru
    _
  // Predicated region
  $region10: #{res_block_forward.6} parent=0 // pred_check
    _
  $region11: #{res_block_forward.6} parent=0 // pred_check_branch
    %13 = sbr.rel (0) target = $region13
  $region12: #{res_block_forward.6} parent=0 // pred_region
    _
  $region13: #{res_block_forward.6} parent=0 // pred_fallthru
    _
  %v14 = vld [vmem:[%s0] sm:$0xf]
  %v15 = vunpack.c.l.bf16 %v14
  %v16 = vld [vmem:[%s1] sm:$0x1]
  %v18 = vlaneseq
  %v19 = vshrl.u32 %v18, 7
  %v20 = vsub.s32 0, %v19
  %v21 = vrot.slane %v16, %v20
  %v23 = vmul.f32 %v15, %v21
  %v24 = vld [vmem:[%s2] sm:$0x1]
  %v26 = vlaneseq
  %v27 = vshrl.u32 %v26, 7
  %v28 = vsub.s32 0, %v27
  %v29 = vrot.slane %v24, %v28
  %v31 = vadd.f32 %v23, %v29
  %v32 = vmax.f32 %v31, 0.0
  %v33 = vpack.c.bf16 %v32, %v32
  %34 = vst [vmem:[%s3] sm:$0xf] %v33
  // Predicated region
  $region14: #{res_block_forward.6} parent=0 // pred_check
    _
  $region15: #{res_block_forward.6} parent=0 // pred_check_branch
    %36 = sbr.rel (0) target = $region17
  $region16: #{res_block_forward.6} parent=0 // pred_region
    _
  $region17: #{res_block_forward.6} parent=0 // pred_fallthru
    _
  // Predicated region
  $region18: #{res_block_forward.6} parent=0 // pred_check
    _
  $region19: #{res_block_forward.6} parent=0 // pred_check_branch
    %38 = sbr.rel (0) target = $region21
  $region20: #{res_block_forward.6} parent=0 // pred_region
    _
  $region21: #{res_block_forward.6} parent=0 // pred_fallthru
    _

// kernel: res_block_forward.7
$region0: #{res_block_forward.7}
  #allocation0 [shape = 'u32[]', space=smem, size = 0x4, offset = 0x4, fixed_abs, tag = 'smem constant byte address 0x4 - core index']
  #allocation1 [shape = 'u32[144,128]{1,0:T(1,128)}', space=vmem, size = 0x12000, scoped, tag = 'internal scratch']
  %s0 = inlined_call_operand.vmem [shape: bf16[128,4], index: 0, kind: input, shape index: {}]
  %s1 = inlined_call_operand.vmem [shape: bf16[4,8], index: 1, kind: input, shape index: {}]
  %s2 = inlined_call_operand.vmem [shape: bf16[128,8], index: 2, kind: output, shape index: {0}]
  %s3 = inlined_call_operand.vmem [shape: f32[1,1,8], index: 3, kind: output, shape index: {1}]
  %s4 = inlined_call_operand.vmem [shape: f32[1,1,8], index: 4, kind: output, shape index: {2}]
  %5 = xla_tuple %s2, %s3, %s4
  %s6 = sld [smem:[#allocation0]]
  $region34: #{res_block_forward.7} parent=0
    _
  %s8 = ssub.s32 1, %s6
  %s9 = scalar_select 0, %s8, %s6
  // Predicated region
  $region2: #{res_block_forward.7} parent=0 // pred_check
    _
  $region3: #{res_block_forward.7} parent=0 // pred_check_branch
    %11 = sbr.rel (0) target = $region5
  $region4: #{res_block_forward.7} parent=0 // pred_region
    _
  $region5: #{res_block_forward.7} parent=0 // pred_fallthru
    _
  // Predicated region
  $region6: #{res_block_forward.7} parent=0 // pred_check
    _
  $region7: #{res_block_forward.7} parent=0 // pred_check_branch
    %13 = sbr.rel (0) target = $region9
  $region8: #{res_block_forward.7} parent=0 // pred_region
    _
  $region9: #{res_block_forward.7} parent=0 // pred_fallthru
    _
  %v15 = vld [vmem:[%s0] sm:$0xf]
  %v16 = vld [vmem:[%s0 + $0x4] sm:$0xf]
  %v17 = vld [vmem:[%s0 + $0x8] sm:$0xf]
  %v18 = vld [vmem:[%s0 + $0xc] sm:$0xf]
  %v19 = vld [vmem:[%s0 + $0x10] sm:$0xf]
  %v20 = vld [vmem:[%s0 + $0x14] sm:$0xf]
  %v21 = vld [vmem:[%s0 + $0x18] sm:$0xf]
  %v22 = vld [vmem:[%s0 + $0x1c] sm:$0xf]
  %v23 = vld [vmem:[%s0 + $0x20] sm:$0xf]
  %v24 = vld [vmem:[%s0 + $0x24] sm:$0xf]
  %v25 = vld [vmem:[%s0 + $0x28] sm:$0xf]
  %v26 = vld [vmem:[%s0 + $0x2c] sm:$0xf]
  %v27 = vld [vmem:[%s0 + $0x30] sm:$0xf]
  %v28 = vld [vmem:[%s0 + $0x34] sm:$0xf]
  %v29 = vld [vmem:[%s0 + $0x38] sm:$0xf]
  %v30 = vld [vmem:[%s0 + $0x3c] sm:$0xf]
  %v31 = vld [vmem:[%s1] sm:$0x3]
  %v48 = vunpack.c.l.b16 %v15
  %v49 = vunpack.c.l.b16 %v16
  %v50 = vunpack.c.l.b16 %v17
  %v51 = vunpack.c.l.b16 %v18
  %v52 = vunpack.c.l.b16 %v19
  %v53 = vunpack.c.l.b16 %v20
  %v54 = vunpack.c.l.b16 %v21
  %v55 = vunpack.c.l.b16 %v22
  %v56 = vunpack.c.l.b16 %v23
  %v57 = vunpack.c.l.b16 %v24
  %v58 = vunpack.c.l.b16 %v25
  %v59 = vunpack.c.l.b16 %v26
  %v60 = vunpack.c.l.b16 %v27
  %v61 = vunpack.c.l.b16 %v28
  %v62 = vunpack.c.l.b16 %v29
  %v63 = vunpack.c.l.b16 %v30
  %v64 = vpack.c.b16 %v49, %v48
  %v65 = vpack.c.b16 %v51, %v50
  %v66 = vpack.c.b16 %v53, %v52
  %v67 = vpack.c.b16 %v55, %v54
  %v68 = vpack.c.b16 %v57, %v56
  %v69 = vpack.c.b16 %v59, %v58
  %v70 = vpack.c.b16 %v61, %v60
  %v71 = vpack.c.b16 %v63, %v62
  %vm72 = vcmask 31744
  %v74 = vsel %vm72, %v64, 0
  %v77 = vsel %vm72, %v65, 0
  %v80 = vsel %vm72, %v66, 0
  %v83 = vsel %vm72, %v67, 0
  %v86 = vsel %vm72, %v68, 0
  %v89 = vsel %vm72, %v69, 0
  %v92 = vsel %vm72, %v70, 0
  %v95 = vsel %vm72, %v71, 0
  %vm97 = vcmask 1041408
  %v99 = vsel %vm97, %v31, 0
  %101 = vmatprep.subr.bf16.mxu0 0
  %102 = vmatpush1.bf16.msra.mxu0 %v99
  %103 = vmatprep.subr.bf16.mxu0 0
  %104 = vmatpush1.bf16.msra.mxu0 0
  %105 = vmatprep.subr.bf16.mxu0 0
  %106 = vmatpush1.bf16.msra.mxu0 0
  %107 = vmatprep.subr.bf16.mxu0 0
  %108 = vmatpush1.bf16.msra.mxu0 0
  %109 = vmatprep.subr.bf16.mxu0 0
  %110 = vmatpush1.bf16.msra.mxu0 0
  %111 = vmatprep.subr.bf16.mxu0 0
  %112 = vmatpush1.bf16.msra.mxu0 0
  %113 = vmatprep.subr.bf16.mxu0 0
  %114 = vmatpush1.bf16.msra.mxu0 0
  %115 = vmatprep.subr.bf16.mxu0 0
  %116 = vmatpush1.bf16.msra.mxu0 0
  %117 = vmatprep.subr.bf16.mxu0 0
  %118 = vmatpush1.bf16.msra.mxu0 0
  %119 = vmatprep.subr.bf16.mxu0 0
  %120 = vmatpush1.bf16.msra.mxu0 0
  %121 = vmatprep.subr.bf16.mxu0 0
  %122 = vmatpush1.bf16.msra.mxu0 0
  %123 = vmatprep.subr.bf16.mxu0 0
  %124 = vmatpush1.bf16.msra.mxu0 0
  %125 = vmatprep.subr.bf16.mxu0 0
  %126 = vmatpush1.bf16.msra.mxu0 0
  %127 = vmatprep.subr.bf16.mxu0 0
  %128 = vmatpush1.bf16.msra.mxu0 0
  %129 = vmatprep.subr.bf16.mxu0 0
  %130 = vmatpush1.bf16.msra.mxu0 0
  %131 = vmatprep.subr.bf16.mxu0 0
  %132 = vmatpush1.bf16.msra.mxu0 0
  %133 = vmatprep.mubr.bf16.mxu0 0
  %134 = vmatmul.mubr.bf16.gmra.mrb[0].mxu0 %v74
  %v135 = vpop.f32.mrb[0].mxu0
  %v136 = vadd.f32 0.0, %v135
  %v137 = vpop.f32.mrb[0].mxu0
  %v138 = vpop.f32.mrb[0].mxu0
  %v139 = vadd.f32 0.0, %v138
  %v140 = vpop.f32.mrb[0].mxu0
  %141 = vmatprep.mubr.bf16.mxu0 0
  %142 = vmatmul.mubr.bf16.gmra.mrb[0].mxu0 %v77
  %v143 = vpop.f32.mrb[0].mxu0
  %v144 = vadd.f32 0.0, %v143
  %v145 = vpop.f32.mrb[0].mxu0
  %v146 = vpop.f32.mrb[0].mxu0
  %v147 = vadd.f32 0.0, %v146
  %v148 = vpop.f32.mrb[0].mxu0
  %149 = vmatprep.mubr.bf16.mxu0 0
  %150 = vmatmul.mubr.bf16.gmra.mrb[0].mxu0 %v80
  %v151 = vpop.f32.mrb[0].mxu0
  %v152 = vadd.f32 0.0, %v151
  %v153 = vpop.f32.mrb[0].mxu0
  %v154 = vpop.f32.mrb[0].mxu0
  %v155 = vadd.f32 0.0, %v154
  %v156 = vpop.f32.mrb[0].mxu0
  %157 = vmatprep.mubr.bf16.mxu0 0
  %158 = vmatmul.mubr.bf16.gmra.mrb[0].mxu0 %v83
  %v159 = vpop.f32.mrb[0].mxu0
  %v160 = vadd.f32 0.0, %v159
  %v161 = vpop.f32.mrb[0].mxu0
  %v162 = vpop.f32.mrb[0].mxu0
  %v163 = vadd.f32 0.0, %v162
  %v164 = vpop.f32.mrb[0].mxu0
  %165 = vmatprep.mubr.bf16.mxu0 0
  %166 = vmatmul.mubr.bf16.gmra.mrb[0].mxu0 %v86
  %v167 = vpop.f32.mrb[0].mxu0
  %v168 = vadd.f32 0.0, %v167
  %v169 = vpop.f32.mrb[0].mxu0
  %v170 = vpop.f32.mrb[0].mxu0
  %v171 = vadd.f32 0.0, %v170
  %v172 = vpop.f32.mrb[0].mxu0
  %173 = vmatprep.mubr.bf16.mxu0 0
  %174 = vmatmul.mubr.bf16.gmra.mrb[0].mxu0 %v89
  %v175 = vpop.f32.mrb[0].mxu0
  %v176 = vadd.f32 0.0, %v175
  %v177 = vpop.f32.mrb[0].mxu0
  %v178 = vpop.f32.mrb[0].mxu0
  %v179 = vadd.f32 0.0, %v178
  %v180 = vpop.f32.mrb[0].mxu0
  %181 = vmatprep.mubr.bf16.mxu0 0
  %182 = vmatmul.mubr.bf16.gmra.mrb[0].mxu0 %v92
  %v183 = vpop.f32.mrb[0].mxu0
  %v184 = vadd.f32 0.0, %v183
  %v185 = vpop.f32.mrb[0].mxu0
  %v186 = vpop.f32.mrb[0].mxu0
  %v187 = vadd.f32 0.0, %v186
  %v188 = vpop.f32.mrb[0].mxu0
  %189 = vmatprep.mubr.bf16.mxu0 0
  %190 = vmatmul.mubr.bf16.gmra.mrb[0].mxu0 %v95
  %v191 = vpop.f32.mrb[0].mxu0
  %v192 = vadd.f32 0.0, %v191
  %v193 = vpop.f32.mrb[0].mxu0
  %v194 = vpop.f32.mrb[0].mxu0
  %v195 = vadd.f32 0.0, %v194
  %v196 = vpop.f32.mrb[0].mxu0
  %197 = vdwg.mxu0
  %v198 = vpack.c.bf16 %v139, %v136
  %v199 = vpack.c.bf16 %v147, %v144
  %v200 = vpack.c.bf16 %v155, %v152
  %v201 = vpack.c.bf16 %v163, %v160
  %v202 = vpack.c.bf16 %v171, %v168
  %v203 = vpack.c.bf16 %v179, %v176
  %v204 = vpack.c.bf16 %v187, %v184
  %v205 = vpack.c.bf16 %v195, %v192
  %v214 = vunpack.c.l.b16 %v198
  %v215 = vunpack.c.h.b16 %v198
  %v216 = vunpack.c.l.b16 %v199
  %v217 = vunpack.c.h.b16 %v199
  %v218 = vunpack.c.l.b16 %v200
  %v219 = vunpack.c.h.b16 %v200
  %v220 = vunpack.c.l.b16 %v201
  %v221 = vunpack.c.h.b16 %v201
  %v222 = vunpack.c.l.b16 %v202
  %v223 = vunpack.c.h.b16 %v202
  %v224 = vunpack.c.l.b16 %v203
  %v225 = vunpack.c.h.b16 %v203
  %v226 = vunpack.c.l.b16 %v204
  %v227 = vunpack.c.h.b16 %v204
  %v228 = vunpack.c.l.b16 %v205
  %v229 = vunpack.c.h.b16 %v205
  %v230 = vpack.c.b16 %v214, %v214
  %v231 = vpack.c.b16 %v215, %v215
  %v232 = vpack.c.b16 %v216, %v216
  %v233 = vpack.c.b16 %v217, %v217
  %v234 = vpack.c.b16 %v218, %v218
  %v235 = vpack.c.b16 %v219, %v219
  %v236 = vpack.c.b16 %v220, %v220
  %v237 = vpack.c.b16 %v221, %v221
  %v238 = vpack.c.b16 %v222, %v222
  %v239 = vpack.c.b16 %v223, %v223
  %v240 = vpack.c.b16 %v224, %v224
  %v241 = vpack.c.b16 %v225, %v225
  %v242 = vpack.c.b16 %v226, %v226
  %v243 = vpack.c.b16 %v227, %v227
  %v244 = vpack.c.b16 %v228, %v228
  %v245 = vpack.c.b16 %v229, %v229
  %vm262 = vcmask 60416
  %263 = vst.msk [vmem:[%s2] sm:$0xf] %vm262, %v230
  %264 = vst.msk [vmem:[%s2 + $0x4] sm:$0xf] %vm262, %v231
  %265 = vst.msk [vmem:[%s2 + $0x8] sm:$0xf] %vm262, %v232
  %266 = vst.msk [vmem:[%s2 + $0xc] sm:$0xf] %vm262, %v233
  %267 = vst.msk [vmem:[%s2 + $0x10] sm:$0xf] %vm262, %v234
  %268 = vst.msk [vmem:[%s2 + $0x14] sm:$0xf] %vm262, %v235
  %269 = vst.msk [vmem:[%s2 + $0x18] sm:$0xf] %vm262, %v236
  %270 = vst.msk [vmem:[%s2 + $0x1c] sm:$0xf] %vm262, %v237
  %271 = vst.msk [vmem:[%s2 + $0x20] sm:$0xf] %vm262, %v238
  %272 = vst.msk [vmem:[%s2 + $0x24] sm:$0xf] %vm262, %v239
  %273 = vst.msk [vmem:[%s2 + $0x28] sm:$0xf] %vm262, %v240
  %274 = vst.msk [vmem:[%s2 + $0x2c] sm:$0xf] %vm262, %v241
  %275 = vst.msk [vmem:[%s2 + $0x30] sm:$0xf] %vm262, %v242
  %276 = vst.msk [vmem:[%s2 + $0x34] sm:$0xf] %vm262, %v243
  %277 = vst.msk [vmem:[%s2 + $0x38] sm:$0xf] %vm262, %v244
  %278 = vst.msk [vmem:[%s2 + $0x3c] sm:$0xf] %vm262, %v245
  %vm279 = vcmask 64512
  %v280 = vsel %vm279, %v136, 0.0
  %v281 = vsel %vm279, %v139, 0.0
  %v282 = vadd.f32 %v280, %v281
  %v283 = vsel %vm279, %v144, 0.0
  %v284 = vadd.f32 %v282, %v283
  %v285 = vsel %vm279, %v147, 0.0
  %v286 = vadd.f32 %v284, %v285
  %v287 = vsel %vm279, %v152, 0.0
  %v288 = vadd.f32 %v286, %v287
  %v289 = vsel %vm279, %v155, 0.0
  %v290 = vadd.f32 %v288, %v289
  %v291 = vsel %vm279, %v160, 0.0
  %v292 = vadd.f32 %v290, %v291
  %v293 = vsel %vm279, %v163, 0.0
  %v294 = vadd.f32 %v292, %v293
  %v295 = vsel %vm279, %v168, 0.0
  %v296 = vadd.f32 %v294, %v295
  %v297 = vsel %vm279, %v171, 0.0
  %v298 = vadd.f32 %v296, %v297
  %v299 = vsel %vm279, %v176, 0.0
  %v300 = vadd.f32 %v298, %v299
  %v301 = vsel %vm279, %v179, 0.0
  %v302 = vadd.f32 %v300, %v301
  %v303 = vsel %vm279, %v184, 0.0
  %v304 = vadd.f32 %v302, %v303
  %v305 = vsel %vm279, %v187, 0.0
  %v306 = vadd.f32 %v304, %v305
  %v307 = vsel %vm279, %v192, 0.0
  %v308 = vadd.f32 %v306, %v307
  %v309 = vsel %vm279, %v195, 0.0
  %v310 = vadd.f32 %v308, %v309
  %v311 = vrot.slane %v310, 4
  %v312 = vadd.f32 %v310, %v311
  %v313 = vrot.slane %v312, 2
  %v314 = vadd.f32 %v312, %v313
  %v315 = vrot.slane %v314, 1
  %v316 = vadd.f32 %v314, %v315
  %vm317 = vcmask 57344
  %318 = vst.msk [vmem:[%s3] sm:$0x1] %vm317, %v316
  %v319 = vmul.f32 %v136, %v136
  %v320 = vmul.f32 %v139, %v139
  %v321 = vmul.f32 %v144, %v144
  %v322 = vmul.f32 %v147, %v147
  %v323 = vmul.f32 %v152, %v152
  %v324 = vmul.f32 %v155, %v155
  %v325 = vmul.f32 %v160, %v160
  %v326 = vmul.f32 %v163, %v163
  %v327 = vmul.f32 %v168, %v168
  %v328 = vmul.f32 %v171, %v171
  %v329 = vmul.f32 %v176, %v176
  %v330 = vmul.f32 %v179, %v179
  %v331 = vmul.f32 %v184, %v184
  %v332 = vmul.f32 %v187, %v187
  %v333 = vmul.f32 %v192, %v192
  %v334 = vmul.f32 %v195, %v195
  %v335 = vsel %vm279, %v319, 0.0
  %v336 = vsel %vm279, %v320, 0.0
  %v337 = vadd.f32 %v335, %v336
  %v338 = vsel %vm279, %v321, 0.0
  %v339 = vadd.f32 %v337, %v338
  %v340 = vsel %vm279, %v322, 0.0
  %v341 = vadd.f32 %v339, %v340
  %v342 = vsel %vm279, %v323, 0.0
  %v343 = vadd.f32 %v341, %v342
  %v344 = vsel %vm279, %v324, 0.0
  %v345 = vadd.f32 %v343, %v344
  %v346 = vsel %vm279, %v325, 0.0
  %v347 = vadd.f32 %v345, %v346
  %v348 = vsel %vm279, %v326, 0.0
  %v349 = vadd.f32 %v347, %v348
  %v350 = vsel %vm279, %v327, 0.0
  %v351 = vadd.f32 %v349, %v350
  %v352 = vsel %vm279, %v328, 0.0
  %v353 = vadd.f32 %v351, %v352
  %v354 = vsel %vm279, %v329, 0.0
  %v355 = vadd.f32 %v353, %v354
  %v356 = vsel %vm279, %v330, 0.0
  %v357 = vadd.f32 %v355, %v356
  %v358 = vsel %vm279, %v331, 0.0
  %v359 = vadd.f32 %v357, %v358
  %v360 = vsel %vm279, %v332, 0.0
  %v361 = vadd.f32 %v359, %v360
  %v362 = vsel %vm279, %v333, 0.0
  %v363 = vadd.f32 %v361, %v362
  %v364 = vsel %vm279, %v334, 0.0
  %v365 = vadd.f32 %v363, %v364
  %v366 = vrot.slane %v365, 4
  %v367 = vadd.f32 %v365, %v366
  %v368 = vrot.slane %v367, 2
  %v369 = vadd.f32 %v367, %v368
  %v370 = vrot.slane %v369, 1
  %v371 = vadd.f32 %v369, %v370
  %372 = vst.msk [vmem:[%s4] sm:$0x1] %vm317, %v371
  // Predicated region
  $region10: #{res_block_forward.7} parent=0 // pred_check
    _
  $region11: #{res_block_forward.7} parent=0 // pred_check_branch
    %374 = sbr.rel (0) target = $region13
  $region12: #{res_block_forward.7} parent=0 // pred_region
    _
  $region13: #{res_block_forward.7} parent=0 // pred_fallthru
    _
  // Predicated region
  $region14: #{res_block_forward.7} parent=0 // pred_check
    _
  $region15: #{res_block_forward.7} parent=0 // pred_check_branch
    %376 = sbr.rel (0) target = $region17
  $region16: #{res_block_forward.7} parent=0 // pred_region
    _
  $region17: #{res_block_forward.7} parent=0 // pred_fallthru
    _
  // Predicated region
  $region18: #{res_block_forward.7} parent=0 // pred_check
    _
  $region19: #{res_block_forward.7} parent=0 // pred_check_branch
    %378 = sbr.rel (0) target = $region21
  $region20: #{res_block_forward.7} parent=0 // pred_region
    _
  $region21: #{res_block_forward.7} parent=0 // pred_fallthru
    _
  // Predicated region
  $region22: #{res_block_forward.7} parent=0 // pred_check
    _
  $region23: #{res_block_forward.7} parent=0 // pred_check_branch
    %380 = sbr.rel (0) target = $region25
  $region24: #{res_block_forward.7} parent=0 // pred_region
    _
  $region25: #{res_block_forward.7} parent=0 // pred_fallthru
    _
  // Predicated region
  $region26: #{res_block_forward.7} parent=0 // pred_check
    _
  $region27: #{res_block_forward.7} parent=0 // pred_check_branch
    %382 = sbr.rel (0) target = $region29
  $region28: #{res_block_forward.7} parent=0 // pred_region
    _
  $region29: #{res_block_forward.7} parent=0 // pred_fallthru
    _
  // Predicated region
  $region30: #{res_block_forward.7} parent=0 // pred_check
    _
  $region31: #{res_block_forward.7} parent=0 // pred_check_branch
    %384 = sbr.rel (0) target = $region33
  $region32: #{res_block_forward.7} parent=0 // pred_region
    _
  $region33: #{res_block_forward.7} parent=0 // pred_fallthru
    _

// kernel: res_block_forward.5
$region0: #{res_block_forward.5}
  #allocation0 [shape = 'u32[]', space=smem, size = 0x4, offset = 0x4, fixed_abs, tag = 'smem constant byte address 0x4 - core index']
  #allocation1 [shape = 'u32[144,128]{1,0:T(1,128)}', space=vmem, size = 0x12000, scoped, tag = 'internal scratch']
  %s0 = inlined_call_operand.vmem [shape: bf16[128,36], index: 0, kind: input, shape index: {}]
  %s1 = inlined_call_operand.vmem [shape: bf16[36,8], index: 1, kind: input, shape index: {}]
  %s2 = inlined_call_operand.vmem [shape: bf16[128,8], index: 2, kind: output, shape index: {0}]
  %s3 = inlined_call_operand.vmem [shape: f32[1,1,8], index: 3, kind: output, shape index: {1}]
  %s4 = inlined_call_operand.vmem [shape: f32[1,1,8], index: 4, kind: output, shape index: {2}]
  %5 = xla_tuple %s2, %s3, %s4
  %s6 = sld [smem:[#allocation0]]
  $region34: #{res_block_forward.5} parent=0
    _
  %s8 = ssub.s32 1, %s6
  %s9 = scalar_select 0, %s8, %s6
  // Predicated region
  $region2: #{res_block_forward.5} parent=0 // pred_check
    _
  $region3: #{res_block_forward.5} parent=0 // pred_check_branch
    %11 = sbr.rel (0) target = $region5
  $region4: #{res_block_forward.5} parent=0 // pred_region
    _
  $region5: #{res_block_forward.5} parent=0 // pred_fallthru
    _
  // Predicated region
  $region6: #{res_block_forward.5} parent=0 // pred_check
    _
  $region7: #{res_block_forward.5} parent=0 // pred_check_branch
    %13 = sbr.rel (0) target = $region9
  $region8: #{res_block_forward.5} parent=0 // pred_region
    _
  $region9: #{res_block_forward.5} parent=0 // pred_fallthru
    _
  %v15 = vld [vmem:[%s0] sm:$0xf]
  %v16 = vld [vmem:[%s0 + $0x4] sm:$0xf]
  %v17 = vld [vmem:[%s0 + $0x8] sm:$0xf]
  %v18 = vld [vmem:[%s0 + $0xc] sm:$0xf]
  %v19 = vld [vmem:[%s0 + $0x10] sm:$0xf]
  %v20 = vld [vmem:[%s0 + $0x14] sm:$0xf]
  %v21 = vld [vmem:[%s0 + $0x18] sm:$0xf]
  %v22 = vld [vmem:[%s0 + $0x1c] sm:$0xf]
  %v23 = vld [vmem:[%s0 + $0x20] sm:$0xf]
  %v24 = vld [vmem:[%s0 + $0x24] sm:$0xf]
  %v25 = vld [vmem:[%s0 + $0x28] sm:$0xf]
  %v26 = vld [vmem:[%s0 + $0x2c] sm:$0xf]
  %v27 = vld [vmem:[%s0 + $0x30] sm:$0xf]
  %v28 = vld [vmem:[%s0 + $0x34] sm:$0xf]
  %v29 = vld [vmem:[%s0 + $0x38] sm:$0xf]
  %v30 = vld [vmem:[%s0 + $0x3c] sm:$0xf]
  %v31 = vld [vmem:[%s1] sm:$0xf]
  %v32 = vld [vmem:[%s1 + $0x4] sm:$0xf]
  %v33 = vld [vmem:[%s1 + $0x8] sm:$0xf]
  %v34 = vld [vmem:[%s1 + $0xc] sm:$0xf]
  %v35 = vld [vmem:[%s1 + $0x10] sm:$0x3]
  %v52 = vunpack.c.l.b16 %v15
  %v53 = vunpack.c.l.b16 %v16
  %v54 = vunpack.c.l.b16 %v17
  %v55 = vunpack.c.l.b16 %v18
  %v56 = vunpack.c.l.b16 %v19
  %v57 = vunpack.c.l.b16 %v20
  %v58 = vunpack.c.l.b16 %v21
  %v59 = vunpack.c.l.b16 %v22
  %v60 = vunpack.c.l.b16 %v23
  %v61 = vunpack.c.l.b16 %v24
  %v62 = vunpack.c.l.b16 %v25
  %v63 = vunpack.c.l.b16 %v26
  %v64 = vunpack.c.l.b16 %v27
  %v65 = vunpack.c.l.b16 %v28
  %v66 = vunpack.c.l.b16 %v29
  %v67 = vunpack.c.l.b16 %v30
  %v68 = vpack.c.b16 %v53, %v52
  %v69 = vpack.c.b16 %v55, %v54
  %v70 = vpack.c.b16 %v57, %v56
  %v71 = vpack.c.b16 %v59, %v58
  %v72 = vpack.c.b16 %v61, %v60
  %v73 = vpack.c.b16 %v63, %v62
  %v74 = vpack.c.b16 %v65, %v64
  %v75 = vpack.c.b16 %v67, %v66
  %v81 = vunpack.c.l.b16 %v31
  %v82 = vunpack.c.l.b16 %v32
  %v83 = vunpack.c.l.b16 %v33
  %v84 = vunpack.c.l.b16 %v34
  %v85 = vunpack.c.l.b16 %v35
  %v86 = vpack.c.b16 %v82, %v81
  %v87 = vpack.c.b16 %v84, %v83
  %v88 = vpack.c.b16 %v85, %v85
  %vm91 = vcmask 293888
  %v93 = vsel %vm91, %v68, 0
  %v96 = vsel %vm91, %v69, 0
  %v99 = vsel %vm91, %v70, 0
  %v102 = vsel %vm91, %v71, 0
  %v105 = vsel %vm91, %v72, 0
  %v108 = vsel %vm91, %v73, 0
  %v111 = vsel %vm91, %v74, 0
  %v114 = vsel %vm91, %v75, 0
  %vm116 = vcmask 1041408
  %v118 = vsel %vm116, %v88, 0
  %120 = vmatprep.subr.bf16.mxu0 0
  %121 = vmatpush1.bf16.msra.mxu0 %v86
  %122 = vmatprep.subr.bf16.mxu0 0
  %123 = vmatpush1.bf16.msra.mxu0 %v87
  %124 = vmatprep.subr.bf16.mxu0 0
  %125 = vmatpush1.bf16.msra.mxu0 %v118
  %126 = vmatprep.subr.bf16.mxu0 0
  %127 = vmatpush1.bf16.msra.mxu0 0
  %128 = vmatprep.subr.bf16.mxu0 0
  %129 = vmatpush1.bf16.msra.mxu0 0
  %130 = vmatprep.subr.bf16.mxu0 0
  %131 = vmatpush1.bf16.msra.mxu0 0
  %132 = vmatprep.subr.bf16.mxu0 0
  %133 = vmatpush1.bf16.msra.mxu0 0
  %134 = vmatprep.subr.bf16.mxu0 0
  %135 = vmatpush1.bf16.msra.mxu0 0
  %136 = vmatprep.subr.bf16.mxu0 0
  %137 = vmatpush1.bf16.msra.mxu0 0
  %138 = vmatprep.subr.bf16.mxu0 0
  %139 = vmatpush1.bf16.msra.mxu0 0
  %140 = vmatprep.subr.bf16.mxu0 0
  %141 = vmatpush1.bf16.msra.mxu0 0
  %142 = vmatprep.subr.bf16.mxu0 0
  %143 = vmatpush1.bf16.msra.mxu0 0
  %144 = vmatprep.subr.bf16.mxu0 0
  %145 = vmatpush1.bf16.msra.mxu0 0
  %146 = vmatprep.subr.bf16.mxu0 0
  %147 = vmatpush1.bf16.msra.mxu0 0
  %148 = vmatprep.subr.bf16.mxu0 0
  %149 = vmatpush1.bf16.msra.mxu0 0
  %150 = vmatprep.subr.bf16.mxu0 0
  %151 = vmatpush1.bf16.msra.mxu0 0
  %152 = vmatprep.mubr.bf16.mxu0 0
  %153 = vmatmul.mubr.bf16.gmra.mrb[0].mxu0 %v93
  %v154 = vpop.f32.mrb[0].mxu0
  %v155 = vadd.f32 0.0, %v154
  %v156 = vpop.f32.mrb[0].mxu0
  %v157 = vpop.f32.mrb[0].mxu0
  %v158 = vadd.f32 0.0, %v157
  %v159 = vpop.f32.mrb[0].mxu0
  %160 = vmatprep.mubr.bf16.mxu0 0
  %161 = vmatmul.mubr.bf16.gmra.mrb[0].mxu0 %v96
  %v162 = vpop.f32.mrb[0].mxu0
  %v163 = vadd.f32 0.0, %v162
  %v164 = vpop.f32.mrb[0].mxu0
  %v165 = vpop.f32.mrb[0].mxu0
  %v166 = vadd.f32 0.0, %v165
  %v167 = vpop.f32.mrb[0].mxu0
  %168 = vmatprep.mubr.bf16.mxu0 0
  %169 = vmatmul.mubr.bf16.gmra.mrb[0].mxu0 %v99
  %v170 = vpop.f32.mrb[0].mxu0
  %v171 = vadd.f32 0.0, %v170
  %v172 = vpop.f32.mrb[0].mxu0
  %v173 = vpop.f32.mrb[0].mxu0
  %v174 = vadd.f32 0.0, %v173
  %v175 = vpop.f32.mrb[0].mxu0
  %176 = vmatprep.mubr.bf16.mxu0 0
  %177 = vmatmul.mubr.bf16.gmra.mrb[0].mxu0 %v102
  %v178 = vpop.f32.mrb[0].mxu0
  %v179 = vadd.f32 0.0, %v178
  %v180 = vpop.f32.mrb[0].mxu0
  %v181 = vpop.f32.mrb[0].mxu0
  %v182 = vadd.f32 0.0, %v181
  %v183 = vpop.f32.mrb[0].mxu0
  %184 = vmatprep.mubr.bf16.mxu0 0
  %185 = vmatmul.mubr.bf16.gmra.mrb[0].mxu0 %v105
  %v186 = vpop.f32.mrb[0].mxu0
  %v187 = vadd.f32 0.0, %v186
  %v188 = vpop.f32.mrb[0].mxu0
  %v189 = vpop.f32.mrb[0].mxu0
  %v190 = vadd.f32 0.0, %v189
  %v191 = vpop.f32.mrb[0].mxu0
  %192 = vmatprep.mubr.bf16.mxu0 0
  %193 = vmatmul.mubr.bf16.gmra.mrb[0].mxu0 %v108
  %v194 = vpop.f32.mrb[0].mxu0
  %v195 = vadd.f32 0.0, %v194
  %v196 = vpop.f32.mrb[0].mxu0
  %v197 = vpop.f32.mrb[0].mxu0
  %v198 = vadd.f32 0.0, %v197
  %v199 = vpop.f32.mrb[0].mxu0
  %200 = vmatprep.mubr.bf16.mxu0 0
  %201 = vmatmul.mubr.bf16.gmra.mrb[0].mxu0 %v111
  %v202 = vpop.f32.mrb[0].mxu0
  %v203 = vadd.f32 0.0, %v202
  %v204 = vpop.f32.mrb[0].mxu0
  %v205 = vpop.f32.mrb[0].mxu0
  %v206 = vadd.f32 0.0, %v205
  %v207 = vpop.f32.mrb[0].mxu0
  %208 = vmatprep.mubr.bf16.mxu0 0
  %209 = vmatmul.mubr.bf16.gmra.mrb[0].mxu0 %v114
  %v210 = vpop.f32.mrb[0].mxu0
  %v211 = vadd.f32 0.0, %v210
  %v212 = vpop.f32.mrb[0].mxu0
  %v213 = vpop.f32.mrb[0].mxu0
  %v214 = vadd.f32 0.0, %v213
  %v215 = vpop.f32.mrb[0].mxu0
  %216 = vdwg.mxu0
  %v217 = vpack.c.bf16 %v158, %v155
  %v218 = vpack.c.bf16 %v166, %v163
  %v219 = vpack.c.bf16 %v174, %v171
  %v220 = vpack.c.bf16 %v182, %v179
  %v221 = vpack.c.bf16 %v190, %v187
  %v222 = vpack.c.bf16 %v198, %v195
  %v223 = vpack.c.bf16 %v206, %v203
  %v224 = vpack.c.bf16 %v214, %v211
  %v233 = vunpack.c.l.b16 %v217
  %v234 = vunpack.c.h.b16 %v217
  %v235 = vunpack.c.l.b16 %v218
  %v236 = vunpack.c.h.b16 %v218
  %v237 = vunpack.c.l.b16 %v219
  %v238 = vunpack.c.h.b16 %v219
  %v239 = vunpack.c.l.b16 %v220
  %v240 = vunpack.c.h.b16 %v220
  %v241 = vunpack.c.l.b16 %v221
  %v242 = vunpack.c.h.b16 %v221
  %v243 = vunpack.c.l.b16 %v222
  %v244 = vunpack.c.h.b16 %v222
  %v245 = vunpack.c.l.b16 %v223
  %v246 = vunpack.c.h.b16 %v223
  %v247 = vunpack.c.l.b16 %v224
  %v248 = vunpack.c.h.b16 %v224
  %v249 = vpack.c.b16 %v233, %v233
  %v250 = vpack.c.b16 %v234, %v234
  %v251 = vpack.c.b16 %v235, %v235
  %v252 = vpack.c.b16 %v236, %v236
  %v253 = vpack.c.b16 %v237, %v237
  %v254 = vpack.c.b16 %v238, %v238
  %v255 = vpack.c.b16 %v239, %v239
  %v256 = vpack.c.b16 %v240, %v240
  %v257 = vpack.c.b16 %v241, %v241
  %v258 = vpack.c.b16 %v242, %v242
  %v259 = vpack.c.b16 %v243, %v243
  %v260 = vpack.c.b16 %v244, %v244
  %v261 = vpack.c.b16 %v245, %v245
  %v262 = vpack.c.b16 %v246, %v246
  %v263 = vpack.c.b16 %v247, %v247
  %v264 = vpack.c.b16 %v248, %v248
  %vm281 = vcmask 60416
  %282 = vst.msk [vmem:[%s2] sm:$0xf] %vm281, %v249
  %283 = vst.msk [vmem:[%s2 + $0x4] sm:$0xf] %vm281, %v250
  %284 = vst.msk [vmem:[%s2 + $0x8] sm:$0xf] %vm281, %v251
  %285 = vst.msk [vmem:[%s2 + $0xc] sm:$0xf] %vm281, %v252
  %286 = vst.msk [vmem:[%s2 + $0x10] sm:$0xf] %vm281, %v253
  %287 = vst.msk [vmem:[%s2 + $0x14] sm:$0xf] %vm281, %v254
  %288 = vst.msk [vmem:[%s2 + $0x18] sm:$0xf] %vm281, %v255
  %289 = vst.msk [vmem:[%s2 + $0x1c] sm:$0xf] %vm281, %v256
  %290 = vst.msk [vmem:[%s2 + $0x20] sm:$0xf] %vm281, %v257
  %291 = vst.msk [vmem:[%s2 + $0x24] sm:$0xf] %vm281, %v258
  %292 = vst.msk [vmem:[%s2 + $0x28] sm:$0xf] %vm281, %v259
  %293 = vst.msk [vmem:[%s2 + $0x2c] sm:$0xf] %vm281, %v260
  %294 = vst.msk [vmem:[%s2 + $0x30] sm:$0xf] %vm281, %v261
  %295 = vst.msk [vmem:[%s2 + $0x34] sm:$0xf] %vm281, %v262
  %296 = vst.msk [vmem:[%s2 + $0x38] sm:$0xf] %vm281, %v263
  %297 = vst.msk [vmem:[%s2 + $0x3c] sm:$0xf] %vm281, %v264
  %vm298 = vcmask 64512
  %v299 = vsel %vm298, %v155, 0.0
  %v300 = vsel %vm298, %v158, 0.0
  %v301 = vadd.f32 %v299, %v300
  %v302 = vsel %vm298, %v163, 0.0
  %v303 = vadd.f32 %v301, %v302
  %v304 = vsel %vm298, %v166, 0.0
  %v305 = vadd.f32 %v303, %v304
  %v306 = vsel %vm298, %v171, 0.0
  %v307 = vadd.f32 %v305, %v306
  %v308 = vsel %vm298, %v174, 0.0
  %v309 = vadd.f32 %v307, %v308
  %v310 = vsel %vm298, %v179, 0.0
  %v311 = vadd.f32 %v309, %v310
  %v312 = vsel %vm298, %v182, 0.0
  %v313 = vadd.f32 %v311, %v312
  %v314 = vsel %vm298, %v187, 0.0
  %v315 = vadd.f32 %v313, %v314
  %v316 = vsel %vm298, %v190, 0.0
  %v317 = vadd.f32 %v315, %v316
  %v318 = vsel %vm298, %v195, 0.0
  %v319 = vadd.f32 %v317, %v318
  %v320 = vsel %vm298, %v198, 0.0
  %v321 = vadd.f32 %v319, %v320
  %v322 = vsel %vm298, %v203, 0.0
  %v323 = vadd.f32 %v321, %v322
  %v324 = vsel %vm298, %v206, 0.0
  %v325 = vadd.f32 %v323, %v324
  %v326 = vsel %vm298, %v211, 0.0
  %v327 = vadd.f32 %v325, %v326
  %v328 = vsel %vm298, %v214, 0.0
  %v329 = vadd.f32 %v327, %v328
  %v330 = vrot.slane %v329, 4
  %v331 = vadd.f32 %v329, %v330
  %v332 = vrot.slane %v331, 2
  %v333 = vadd.f32 %v331, %v332
  %v334 = vrot.slane %v333, 1
  %v335 = vadd.f32 %v333, %v334
  %vm336 = vcmask 57344
  %337 = vst.msk [vmem:[%s3] sm:$0x1] %vm336, %v335
  %v338 = vmul.f32 %v155, %v155
  %v339 = vmul.f32 %v158, %v158
  %v340 = vmul.f32 %v163, %v163
  %v341 = vmul.f32 %v166, %v166
  %v342 = vmul.f32 %v171, %v171
  %v343 = vmul.f32 %v174, %v174
  %v344 = vmul.f32 %v179, %v179
  %v345 = vmul.f32 %v182, %v182
  %v346 = vmul.f32 %v187, %v187
  %v347 = vmul.f32 %v190, %v190
  %v348 = vmul.f32 %v195, %v195
  %v349 = vmul.f32 %v198, %v198
  %v350 = vmul.f32 %v203, %v203
  %v351 = vmul.f32 %v206, %v206
  %v352 = vmul.f32 %v211, %v211
  %v353 = vmul.f32 %v214, %v214
  %v354 = vsel %vm298, %v338, 0.0
  %v355 = vsel %vm298, %v339, 0.0
  %v356 = vadd.f32 %v354, %v355
  %v357 = vsel %vm298, %v340, 0.0
  %v358 = vadd.f32 %v356, %v357
  %v359 = vsel %vm298, %v341, 0.0
  %v360 = vadd.f32 %v358, %v359
  %v361 = vsel %vm298, %v342, 0.0
  %v362 = vadd.f32 %v360, %v361
  %v363 = vsel %vm298, %v343, 0.0
  %v364 = vadd.f32 %v362, %v363
  %v365 = vsel %vm298, %v344, 0.0
  %v366 = vadd.f32 %v364, %v365
  %v367 = vsel %vm298, %v345, 0.0
  %v368 = vadd.f32 %v366, %v367
  %v369 = vsel %vm298, %v346, 0.0
  %v370 = vadd.f32 %v368, %v369
  %v371 = vsel %vm298, %v347, 0.0
  %v372 = vadd.f32 %v370, %v371
  %v373 = vsel %vm298, %v348, 0.0
  %v374 = vadd.f32 %v372, %v373
  %v375 = vsel %vm298, %v349, 0.0
  %v376 = vadd.f32 %v374, %v375
  %v377 = vsel %vm298, %v350, 0.0
  %v378 = vadd.f32 %v376, %v377
  %v379 = vsel %vm298, %v351, 0.0
  %v380 = vadd.f32 %v378, %v379
  %v381 = vsel %vm298, %v352, 0.0
  %v382 = vadd.f32 %v380, %v381
  %v383 = vsel %vm298, %v353, 0.0
  %v384 = vadd.f32 %v382, %v383
  %v385 = vrot.slane %v384, 4
  %v386 = vadd.f32 %v384, %v385
  %v387 = vrot.slane %v386, 2
  %v388 = vadd.f32 %v386, %v387
  %v389 = vrot.slane %v388, 1
  %v390 = vadd.f32 %v388, %v389
  %391 = vst.msk [vmem:[%s4] sm:$0x1] %vm336, %v390
  // Predicated region
  $region10: #{res_block_forward.5} parent=0 // pred_check
    _
  $region11: #{res_block_forward.5} parent=0 // pred_check_branch
    %393 = sbr.rel (0) target = $region13
  $region12: #{res_block_forward.5} parent=0 // pred_region
    _
  $region13: #{res_block_forward.5} parent=0 // pred_fallthru
    _
  // Predicated region
  $region14: #{res_block_forward.5} parent=0 // pred_check
    _
  $region15: #{res_block_forward.5} parent=0 // pred_check_branch
    %395 = sbr.rel (0) target = $region17
  $region16: #{res_block_forward.5} parent=0 // pred_region
    _
  $region17: #{res_block_forward.5} parent=0 // pred_fallthru
    _
  // Predicated region
  $region18: #{res_block_forward.5} parent=0 // pred_check
    _
  $region19: #{res_block_forward.5} parent=0 // pred_check_branch
    %397 = sbr.rel (0) target = $region21
  $region20: #{res_block_forward.5} parent=0 // pred_region
    _
  $region21: #{res_block_forward.5} parent=0 // pred_fallthru
    _
  // Predicated region
  $region22: #{res_block_forward.5} parent=0 // pred_check
    _
  $region23: #{res_block_forward.5} parent=0 // pred_check_branch
    %399 = sbr.rel (0) target = $region25
  $region24: #{res_block_forward.5} parent=0 // pred_region
    _
  $region25: #{res_block_forward.5} parent=0 // pred_fallthru
    _
  // Predicated region
  $region26: #{res_block_forward.5} parent=0 // pred_check
    _
  $region27: #{res_block_forward.5} parent=0 // pred_check_branch
    %401 = sbr.rel (0) target = $region29
  $region28: #{res_block_forward.5} parent=0 // pred_region
    _
  $region29: #{res_block_forward.5} parent=0 // pred_fallthru
    _
  // Predicated region
  $region30: #{res_block_forward.5} parent=0 // pred_check
    _
  $region31: #{res_block_forward.5} parent=0 // pred_check_branch
    %403 = sbr.rel (0) target = $region33
  $region32: #{res_block_forward.5} parent=0 // pred_region
    _
  $region33: #{res_block_forward.5} parent=0 // pred_fallthru
    _

// kernel: res_block_forward.9
$region0: #{res_block_forward.9}
  #allocation0 [shape = 'u32[]', space=smem, size = 0x4, offset = 0x4, fixed_abs, tag = 'smem constant byte address 0x4 - core index']
  #allocation1 [shape = 'u32[144,128]{1,0:T(1,128)}', space=vmem, size = 0x12000, scoped, tag = 'internal scratch']
  %s0 = inlined_call_operand.vmem [shape: bf16[8,128], index: 0, kind: input, shape index: {}]
  %s1 = inlined_call_operand.vmem [shape: f32[1,128], index: 1, kind: input, shape index: {}]
  %s2 = inlined_call_operand.vmem [shape: f32[1,128], index: 2, kind: input, shape index: {}]
  %s3 = inlined_call_operand.vmem [shape: bf16[8,128], index: 3, kind: input, shape index: {}]
  %s4 = inlined_call_operand.vmem [shape: f32[1,128], index: 4, kind: input, shape index: {}]
  %s5 = inlined_call_operand.vmem [shape: f32[1,128], index: 5, kind: input, shape index: {}]
  %s6 = inlined_call_operand.vmem [shape: f32[8,128], index: 6, kind: output, shape index: {}]
  %s7 = sld [smem:[#allocation0]]
  $region34: #{res_block_forward.9} parent=0
    _
  %s9 = ssub.s32 1, %s7
  %s10 = scalar_select 0, %s9, %s7
  // Predicated region
  $region2: #{res_block_forward.9} parent=0 // pred_check
    _
  $region3: #{res_block_forward.9} parent=0 // pred_check_branch
    %12 = sbr.rel (0) target = $region5
  $region4: #{res_block_forward.9} parent=0 // pred_region
    _
  $region5: #{res_block_forward.9} parent=0 // pred_fallthru
    _
  // Predicated region
  $region6: #{res_block_forward.9} parent=0 // pred_check
    _
  $region7: #{res_block_forward.9} parent=0 // pred_check_branch
    %14 = sbr.rel (0) target = $region9
  $region8: #{res_block_forward.9} parent=0 // pred_region
    _
  $region9: #{res_block_forward.9} parent=0 // pred_fallthru
    _
  // Predicated region
  $region10: #{res_block_forward.9} parent=0 // pred_check
    _
  $region11: #{res_block_forward.9} parent=0 // pred_check_branch
    %16 = sbr.rel (0) target = $region13
  $region12: #{res_block_forward.9} parent=0 // pred_region
    _
  $region13: #{res_block_forward.9} parent=0 // pred_fallthru
    _
  // Predicated region
  $region14: #{res_block_forward.9} parent=0 // pred_check
    _
  $region15: #{res_block_forward.9} parent=0 // pred_check_branch
    %18 = sbr.rel (0) target = $region17
  $region16: #{res_block_forward.9} parent=0 // pred_region
    _
  $region17: #{res_block_forward.9} parent=0 // pred_fallthru
    _
  // Predicated region
  $region18: #{res_block_forward.9} parent=0 // pred_check
    _
  $region19: #{res_block_forward.9} parent=0 // pred_check_branch
    %20 = sbr.rel (0) target = $region21
  $region20: #{res_block_forward.9} parent=0 // pred_region
    _
  $region21: #{res_block_forward.9} parent=0 // pred_fallthru
    _
  // Predicated region
  $region22: #{res_block_forward.9} parent=0 // pred_check
    _
  $region23: #{res_block_forward.9} parent=0 // pred_check_branch
    %22 = sbr.rel (0) target = $region25
  $region24: #{res_block_forward.9} parent=0 // pred_region
    _
  $region25: #{res_block_forward.9} parent=0 // pred_fallthru
    _
  %v23 = vld [vmem:[%s3] sm:$0xf]
  %v24 = vunpack.c.l.bf16 %v23
  %v25 = vld [vmem:[%s4] sm:$0x1]
  %v27 = vlaneseq
  %v28 = vshrl.u32 %v27, 7
  %v29 = vsub.s32 0, %v28
  %v30 = vrot.slane %v25, %v29
  %v32 = vmul.f32 %v24, %v30
  %v33 = vld [vmem:[%s5] sm:$0x1]
  %v35 = vlaneseq
  %v36 = vshrl.u32 %v35, 7
  %v37 = vsub.s32 0, %v36
  %v38 = vrot.slane %v33, %v37
  %v40 = vadd.f32 %v32, %v38
  %v41 = vld [vmem:[%s0] sm:$0xf]
  %v42 = vunpack.c.l.bf16 %v41
  %v43 = vld [vmem:[%s1] sm:$0x1]
  %v45 = vlaneseq
  %v46 = vshrl.u32 %v45, 7
  %v47 = vsub.s32 0, %v46
  %v48 = vrot.slane %v43, %v47
  %v50 = vmul.f32 %v42, %v48
  %v51 = vld [vmem:[%s2] sm:$0x1]
  %v53 = vlaneseq
  %v54 = vshrl.u32 %v53, 7
  %v55 = vsub.s32 0, %v54
  %v56 = vrot.slane %v51, %v55
  %v58 = vadd.f32 %v50, %v56
  %v59 = vmax.f32 %v58, 0.0
  %v60 = vadd.f32 %v59, %v40
  %v61 = vmax.f32 %v60, 0.0
  %62 = vst [vmem:[%s6] sm:$0xff] %v61
  // Predicated region
  $region26: #{res_block_forward.9} parent=0 // pred_check
    _
  $region27: #{res_block_forward.9} parent=0 // pred_check_branch
    %64 = sbr.rel (0) target = $region29
  $region28: #{res_block_forward.9} parent=0 // pred_region
    _
  $region29: #{res_block_forward.9} parent=0 // pred_fallthru
    _
  // Predicated region
  $region30: #{res_block_forward.9} parent=0 // pred_check
    _
  $region31: #{res_block_forward.9} parent=0 // pred_check_branch
    %66 = sbr.rel (0) target = $region33
  $region32: #{res_block_forward.9} parent=0 // pred_region
    _
  $region33: #{res_block_forward.9} parent=0 // pred_fallthru
    _

// kernel: res_block_forward.8
$region0: #{res_block_forward.8}
  #allocation0 [shape = 'u32[]', space=smem, size = 0x4, offset = 0x4, fixed_abs, tag = 'smem constant byte address 0x4 - core index']
  #allocation1 [shape = 'u32[144,128]{1,0:T(1,128)}', space=vmem, size = 0x12000, scoped, tag = 'internal scratch']
  %s0 = inlined_call_operand.vmem [shape: bf16[128,72], index: 0, kind: input, shape index: {}]
  %s1 = inlined_call_operand.vmem [shape: bf16[72,8], index: 1, kind: input, shape index: {}]
  %s2 = inlined_call_operand.vmem [shape: bf16[128,8], index: 2, kind: output, shape index: {0}]
  %s3 = inlined_call_operand.vmem [shape: f32[1,1,8], index: 3, kind: output, shape index: {1}]
  %s4 = inlined_call_operand.vmem [shape: f32[1,1,8], index: 4, kind: output, shape index: {2}]
  %5 = xla_tuple %s2, %s3, %s4
  %s6 = sld [smem:[#allocation0]]
  $region34: #{res_block_forward.8} parent=0
    _
  %s8 = ssub.s32 1, %s6
  %s9 = scalar_select 0, %s8, %s6
  // Predicated region
  $region2: #{res_block_forward.8} parent=0 // pred_check
    _
  $region3: #{res_block_forward.8} parent=0 // pred_check_branch
    %11 = sbr.rel (0) target = $region5
  $region4: #{res_block_forward.8} parent=0 // pred_region
    _
  $region5: #{res_block_forward.8} parent=0 // pred_fallthru
    _
  // Predicated region
  $region6: #{res_block_forward.8} parent=0 // pred_check
    _
  $region7: #{res_block_forward.8} parent=0 // pred_check_branch
    %13 = sbr.rel (0) target = $region9
  $region8: #{res_block_forward.8} parent=0 // pred_region
    _
  $region9: #{res_block_forward.8} parent=0 // pred_fallthru
    _
  %v15 = vld [vmem:[%s0] sm:$0xf]
  %v16 = vld [vmem:[%s0 + $0x4] sm:$0xf]
  %v17 = vld [vmem:[%s0 + $0x8] sm:$0xf]
  %v18 = vld [vmem:[%s0 + $0xc] sm:$0xf]
  %v19 = vld [vmem:[%s0 + $0x10] sm:$0xf]
  %v20 = vld [vmem:[%s0 + $0x14] sm:$0xf]
  %v21 = vld [vmem:[%s0 + $0x18] sm:$0xf]
  %v22 = vld [vmem:[%s0 + $0x1c] sm:$0xf]
  %v23 = vld [vmem:[%s0 + $0x20] sm:$0xf]
  %v24 = vld [vmem:[%s0 + $0x24] sm:$0xf]
  %v25 = vld [vmem:[%s0 + $0x28] sm:$0xf]
  %v26 = vld [vmem:[%s0 + $0x2c] sm:$0xf]
  %v27 = vld [vmem:[%s0 + $0x30] sm:$0xf]
  %v28 = vld [vmem:[%s0 + $0x34] sm:$0xf]
  %v29 = vld [vmem:[%s0 + $0x38] sm:$0xf]
  %v30 = vld [vmem:[%s0 + $0x3c] sm:$0xf]
  %v31 = vld [vmem:[%s1] sm:$0xf]
  %v32 = vld [vmem:[%s1 + $0x4] sm:$0xf]
  %v33 = vld [vmem:[%s1 + $0x8] sm:$0xf]
  %v34 = vld [vmem:[%s1 + $0xc] sm:$0xf]
  %v35 = vld [vmem:[%s1 + $0x10] sm:$0xf]
  %v36 = vld [vmem:[%s1 + $0x14] sm:$0xf]
  %v37 = vld [vmem:[%s1 + $0x18] sm:$0xf]
  %v38 = vld [vmem:[%s1 + $0x1c] sm:$0xf]
  %v39 = vld [vmem:[%s1 + $0x20] sm:$0xf]
  %v56 = vunpack.c.l.b16 %v15
  %v57 = vunpack.c.l.b16 %v16
  %v58 = vunpack.c.l.b16 %v17
  %v59 = vunpack.c.l.b16 %v18
  %v60 = vunpack.c.l.b16 %v19
  %v61 = vunpack.c.l.b16 %v20
  %v62 = vunpack.c.l.b16 %v21
  %v63 = vunpack.c.l.b16 %v22
  %v64 = vunpack.c.l.b16 %v23
  %v65 = vunpack.c.l.b16 %v24
  %v66 = vunpack.c.l.b16 %v25
  %v67 = vunpack.c.l.b16 %v26
  %v68 = vunpack.c.l.b16 %v27
  %v69 = vunpack.c.l.b16 %v28
  %v70 = vunpack.c.l.b16 %v29
  %v71 = vunpack.c.l.b16 %v30
  %v72 = vpack.c.b16 %v57, %v56
  %v73 = vpack.c.b16 %v59, %v58
  %v74 = vpack.c.b16 %v61, %v60
  %v75 = vpack.c.b16 %v63, %v62
  %v76 = vpack.c.b16 %v65, %v64
  %v77 = vpack.c.b16 %v67, %v66
  %v78 = vpack.c.b16 %v69, %v68
  %v79 = vpack.c.b16 %v71, %v70
  %v89 = vunpack.c.l.b16 %v31
  %v90 = vunpack.c.l.b16 %v32
  %v91 = vunpack.c.l.b16 %v33
  %v92 = vunpack.c.l.b16 %v34
  %v93 = vunpack.c.l.b16 %v35
  %v94 = vunpack.c.l.b16 %v36
  %v95 = vunpack.c.l.b16 %v37
  %v96 = vunpack.c.l.b16 %v38
  %v97 = vunpack.c.l.b16 %v39
  %v98 = vpack.c.b16 %v90, %v89
  %v99 = vpack.c.b16 %v92, %v91
  %v100 = vpack.c.b16 %v94, %v93
  %v101 = vpack.c.b16 %v96, %v95
  %v102 = vpack.c.b16 %v97, %v97
  %vm107 = vcmask 588800
  %v109 = vsel %vm107, %v72, 0
  %v112 = vsel %vm107, %v73, 0
  %v115 = vsel %vm107, %v74, 0
  %v118 = vsel %vm107, %v75, 0
  %v121 = vsel %vm107, %v76, 0
  %v124 = vsel %vm107, %v77, 0
  %v127 = vsel %vm107, %v78, 0
  %v130 = vsel %vm107, %v79, 0
  %vm132 = vcmask 1043456
  %v134 = vsel %vm132, %v102, 0
  %136 = vmatprep.subr.bf16.mxu0 0
  %137 = vmatpush1.bf16.msra.mxu0 %v98
  %138 = vmatprep.subr.bf16.mxu0 0
  %139 = vmatpush1.bf16.msra.mxu0 %v99
  %140 = vmatprep.subr.bf16.mxu0 0
  %141 = vmatpush1.bf16.msra.mxu0 %v100
  %142 = vmatprep.subr.bf16.mxu0 0
  %143 = vmatpush1.bf16.msra.mxu0 %v101
  %144 = vmatprep.subr.bf16.mxu0 0
  %145 = vmatpush1.bf16.msra.mxu0 %v134
  %146 = vmatprep.subr.bf16.mxu0 0
  %147 = vmatpush1.bf16.msra.mxu0 0
  %148 = vmatprep.subr.bf16.mxu0 0
  %149 = vmatpush1.bf16.msra.mxu0 0
  %150 = vmatprep.subr.bf16.mxu0 0
  %151 = vmatpush1.bf16.msra.mxu0 0
  %152 = vmatprep.subr.bf16.mxu0 0
  %153 = vmatpush1.bf16.msra.mxu0 0
  %154 = vmatprep.subr.bf16.mxu0 0
  %155 = vmatpush1.bf16.msra.mxu0 0
  %156 = vmatprep.subr.bf16.mxu0 0
  %157 = vmatpush1.bf16.msra.mxu0 0
  %158 = vmatprep.subr.bf16.mxu0 0
  %159 = vmatpush1.bf16.msra.mxu0 0
  %160 = vmatprep.subr.bf16.mxu0 0
  %161 = vmatpush1.bf16.msra.mxu0 0
  %162 = vmatprep.subr.bf16.mxu0 0
  %163 = vmatpush1.bf16.msra.mxu0 0
  %164 = vmatprep.subr.bf16.mxu0 0
  %165 = vmatpush1.bf16.msra.mxu0 0
  %166 = vmatprep.subr.bf16.mxu0 0
  %167 = vmatpush1.bf16.msra.mxu0 0
  %168 = vmatprep.mubr.bf16.mxu0 0
  %169 = vmatmul.mubr.bf16.gmra.mrb[0].mxu0 %v109
  %v170 = vpop.f32.mrb[0].mxu0
  %v171 = vadd.f32 0.0, %v170
  %v172 = vpop.f32.mrb[0].mxu0
  %v173 = vpop.f32.mrb[0].mxu0
  %v174 = vadd.f32 0.0, %v173
  %v175 = vpop.f32.mrb[0].mxu0
  %176 = vmatprep.mubr.bf16.mxu0 0
  %177 = vmatmul.mubr.bf16.gmra.mrb[0].mxu0 %v112
  %v178 = vpop.f32.mrb[0].mxu0
  %v179 = vadd.f32 0.0, %v178
  %v180 = vpop.f32.mrb[0].mxu0
  %v181 = vpop.f32.mrb[0].mxu0
  %v182 = vadd.f32 0.0, %v181
  %v183 = vpop.f32.mrb[0].mxu0
  %184 = vmatprep.mubr.bf16.mxu0 0
  %185 = vmatmul.mubr.bf16.gmra.mrb[0].mxu0 %v115
  %v186 = vpop.f32.mrb[0].mxu0
  %v187 = vadd.f32 0.0, %v186
  %v188 = vpop.f32.mrb[0].mxu0
  %v189 = vpop.f32.mrb[0].mxu0
  %v190 = vadd.f32 0.0, %v189
  %v191 = vpop.f32.mrb[0].mxu0
  %192 = vmatprep.mubr.bf16.mxu0 0
  %193 = vmatmul.mubr.bf16.gmra.mrb[0].mxu0 %v118
  %v194 = vpop.f32.mrb[0].mxu0
  %v195 = vadd.f32 0.0, %v194
  %v196 = vpop.f32.mrb[0].mxu0
  %v197 = vpop.f32.mrb[0].mxu0
  %v198 = vadd.f32 0.0, %v197
  %v199 = vpop.f32.mrb[0].mxu0
  %200 = vmatprep.mubr.bf16.mxu0 0
  %201 = vmatmul.mubr.bf16.gmra.mrb[0].mxu0 %v121
  %v202 = vpop.f32.mrb[0].mxu0
  %v203 = vadd.f32 0.0, %v202
  %v204 = vpop.f32.mrb[0].mxu0
  %v205 = vpop.f32.mrb[0].mxu0
  %v206 = vadd.f32 0.0, %v205
  %v207 = vpop.f32.mrb[0].mxu0
  %208 = vmatprep.mubr.bf16.mxu0 0
  %209 = vmatmul.mubr.bf16.gmra.mrb[0].mxu0 %v124
  %v210 = vpop.f32.mrb[0].mxu0
  %v211 = vadd.f32 0.0, %v210
  %v212 = vpop.f32.mrb[0].mxu0
  %v213 = vpop.f32.mrb[0].mxu0
  %v214 = vadd.f32 0.0, %v213
  %v215 = vpop.f32.mrb[0].mxu0
  %216 = vmatprep.mubr.bf16.mxu0 0
  %217 = vmatmul.mubr.bf16.gmra.mrb[0].mxu0 %v127
  %v218 = vpop.f32.mrb[0].mxu0
  %v219 = vadd.f32 0.0, %v218
  %v220 = vpop.f32.mrb[0].mxu0
  %v221 = vpop.f32.mrb[0].mxu0
  %v222 = vadd.f32 0.0, %v221
  %v223 = vpop.f32.mrb[0].mxu0
  %224 = vmatprep.mubr.bf16.mxu0 0
  %225 = vmatmul.mubr.bf16.gmra.mrb[0].mxu0 %v130
  %v226 = vpop.f32.mrb[0].mxu0
  %v227 = vadd.f32 0.0, %v226
  %v228 = vpop.f32.mrb[0].mxu0
  %v229 = vpop.f32.mrb[0].mxu0
  %v230 = vadd.f32 0.0, %v229
  %v231 = vpop.f32.mrb[0].mxu0
  %232 = vdwg.mxu0
  %v233 = vpack.c.bf16 %v174, %v171
  %v234 = vpack.c.bf16 %v182, %v179
  %v235 = vpack.c.bf16 %v190, %v187
  %v236 = vpack.c.bf16 %v198, %v195
  %v237 = vpack.c.bf16 %v206, %v203
  %v238 = vpack.c.bf16 %v214, %v211
  %v239 = vpack.c.bf16 %v222, %v219
  %v240 = vpack.c.bf16 %v230, %v227
  %v249 = vunpack.c.l.b16 %v233
  %v250 = vunpack.c.h.b16 %v233
  %v251 = vunpack.c.l.b16 %v234
  %v252 = vunpack.c.h.b16 %v234
  %v253 = vunpack.c.l.b16 %v235
  %v254 = vunpack.c.h.b16 %v235
  %v255 = vunpack.c.l.b16 %v236
  %v256 = vunpack.c.h.b16 %v236
  %v257 = vunpack.c.l.b16 %v237
  %v258 = vunpack.c.h.b16 %v237
  %v259 = vunpack.c.l.b16 %v238
  %v260 = vunpack.c.h.b16 %v238
  %v261 = vunpack.c.l.b16 %v239
  %v262 = vunpack.c.h.b16 %v239
  %v263 = vunpack.c.l.b16 %v240
  %v264 = vunpack.c.h.b16 %v240
  %v265 = vpack.c.b16 %v249, %v249
  %v266 = vpack.c.b16 %v250, %v250
  %v267 = vpack.c.b16 %v251, %v251
  %v268 = vpack.c.b16 %v252, %v252
  %v269 = vpack.c.b16 %v253, %v253
  %v270 = vpack.c.b16 %v254, %v254
  %v271 = vpack.c.b16 %v255, %v255
  %v272 = vpack.c.b16 %v256, %v256
  %v273 = vpack.c.b16 %v257, %v257
  %v274 = vpack.c.b16 %v258, %v258
  %v275 = vpack.c.b16 %v259, %v259
  %v276 = vpack.c.b16 %v260, %v260
  %v277 = vpack.c.b16 %v261, %v261
  %v278 = vpack.c.b16 %v262, %v262
  %v279 = vpack.c.b16 %v263, %v263
  %v280 = vpack.c.b16 %v264, %v264
  %vm297 = vcmask 60416
  %298 = vst.msk [vmem:[%s2] sm:$0xf] %vm297, %v265
  %299 = vst.msk [vmem:[%s2 + $0x4] sm:$0xf] %vm297, %v266
  %300 = vst.msk [vmem:[%s2 + $0x8] sm:$0xf] %vm297, %v267
  %301 = vst.msk [vmem:[%s2 + $0xc] sm:$0xf] %vm297, %v268
  %302 = vst.msk [vmem:[%s2 + $0x10] sm:$0xf] %vm297, %v269
  %303 = vst.msk [vmem:[%s2 + $0x14] sm:$0xf] %vm297, %v270
  %304 = vst.msk [vmem:[%s2 + $0x18] sm:$0xf] %vm297, %v271
  %305 = vst.msk [vmem:[%s2 + $0x1c] sm:$0xf] %vm297, %v272
  %306 = vst.msk [vmem:[%s2 + $0x20] sm:$0xf] %vm297, %v273
  %307 = vst.msk [vmem:[%s2 + $0x24] sm:$0xf] %vm297, %v274
  %308 = vst.msk [vmem:[%s2 + $0x28] sm:$0xf] %vm297, %v275
  %309 = vst.msk [vmem:[%s2 + $0x2c] sm:$0xf] %vm297, %v276
  %310 = vst.msk [vmem:[%s2 + $0x30] sm:$0xf] %vm297, %v277
  %311 = vst.msk [vmem:[%s2 + $0x34] sm:$0xf] %vm297, %v278
  %312 = vst.msk [vmem:[%s2 + $0x38] sm:$0xf] %vm297, %v279
  %313 = vst.msk [vmem:[%s2 + $0x3c] sm:$0xf] %vm297, %v280
  %vm314 = vcmask 64512
  %v315 = vsel %vm314, %v171, 0.0
  %v316 = vsel %vm314, %v174, 0.0
  %v317 = vadd.f32 %v315, %v316
  %v318 = vsel %vm314, %v179, 0.0
  %v319 = vadd.f32 %v317, %v318
  %v320 = vsel %vm314, %v182, 0.0
  %v321 = vadd.f32 %v319, %v320
  %v322 = vsel %vm314, %v187, 0.0
  %v323 = vadd.f32 %v321, %v322
  %v324 = vsel %vm314, %v190, 0.0
  %v325 = vadd.f32 %v323, %v324
  %v326 = vsel %vm314, %v195, 0.0
  %v327 = vadd.f32 %v325, %v326
  %v328 = vsel %vm314, %v198, 0.0
  %v329 = vadd.f32 %v327, %v328
  %v330 = vsel %vm314, %v203, 0.0
  %v331 = vadd.f32 %v329, %v330
  %v332 = vsel %vm314, %v206, 0.0
  %v333 = vadd.f32 %v331, %v332
  %v334 = vsel %vm314, %v211, 0.0
  %v335 = vadd.f32 %v333, %v334
  %v336 = vsel %vm314, %v214, 0.0
  %v337 = vadd.f32 %v335, %v336
  %v338 = vsel %vm314, %v219, 0.0
  %v339 = vadd.f32 %v337, %v338
  %v340 = vsel %vm314, %v222, 0.0
  %v341 = vadd.f32 %v339, %v340
  %v342 = vsel %vm314, %v227, 0.0
  %v343 = vadd.f32 %v341, %v342
  %v344 = vsel %vm314, %v230, 0.0
  %v345 = vadd.f32 %v343, %v344
  %v346 = vrot.slane %v345, 4
  %v347 = vadd.f32 %v345, %v346
  %v348 = vrot.slane %v347, 2
  %v349 = vadd.f32 %v347, %v348
  %v350 = vrot.slane %v349, 1
  %v351 = vadd.f32 %v349, %v350
  %vm352 = vcmask 57344
  %353 = vst.msk [vmem:[%s3] sm:$0x1] %vm352, %v351
  %v354 = vmul.f32 %v171, %v171
  %v355 = vmul.f32 %v174, %v174
  %v356 = vmul.f32 %v179, %v179
  %v357 = vmul.f32 %v182, %v182
  %v358 = vmul.f32 %v187, %v187
  %v359 = vmul.f32 %v190, %v190
  %v360 = vmul.f32 %v195, %v195
  %v361 = vmul.f32 %v198, %v198
  %v362 = vmul.f32 %v203, %v203
  %v363 = vmul.f32 %v206, %v206
  %v364 = vmul.f32 %v211, %v211
  %v365 = vmul.f32 %v214, %v214
  %v366 = vmul.f32 %v219, %v219
  %v367 = vmul.f32 %v222, %v222
  %v368 = vmul.f32 %v227, %v227
  %v369 = vmul.f32 %v230, %v230
  %v370 = vsel %vm314, %v354, 0.0
  %v371 = vsel %vm314, %v355, 0.0
  %v372 = vadd.f32 %v370, %v371
  %v373 = vsel %vm314, %v356, 0.0
  %v374 = vadd.f32 %v372, %v373
  %v375 = vsel %vm314, %v357, 0.0
  %v376 = vadd.f32 %v374, %v375
  %v377 = vsel %vm314, %v358, 0.0
  %v378 = vadd.f32 %v376, %v377
  %v379 = vsel %vm314, %v359, 0.0
  %v380 = vadd.f32 %v378, %v379
  %v381 = vsel %vm314, %v360, 0.0
  %v382 = vadd.f32 %v380, %v381
  %v383 = vsel %vm314, %v361, 0.0
  %v384 = vadd.f32 %v382, %v383
  %v385 = vsel %vm314, %v362, 0.0
  %v386 = vadd.f32 %v384, %v385
  %v387 = vsel %vm314, %v363, 0.0
  %v388 = vadd.f32 %v386, %v387
  %v389 = vsel %vm314, %v364, 0.0
  %v390 = vadd.f32 %v388, %v389
  %v391 = vsel %vm314, %v365, 0.0
  %v392 = vadd.f32 %v390, %v391
  %v393 = vsel %vm314, %v366, 0.0
  %v394 = vadd.f32 %v392, %v393
  %v395 = vsel %vm314, %v367, 0.0
  %v396 = vadd.f32 %v394, %v395
  %v397 = vsel %vm314, %v368, 0.0
  %v398 = vadd.f32 %v396, %v397
  %v399 = vsel %vm314, %v369, 0.0
  %v400 = vadd.f32 %v398, %v399
  %v401 = vrot.slane %v400, 4
  %v402 = vadd.f32 %v400, %v401
  %v403 = vrot.slane %v402, 2
  %v404 = vadd.f32 %v402, %v403
  %v405 = vrot.slane %v404, 1
  %v406 = vadd.f32 %v404, %v405
  %407 = vst.msk [vmem:[%s4] sm:$0x1] %vm352, %v406
  // Predicated region
  $region10: #{res_block_forward.8} parent=0 // pred_check
    _
  $region11: #{res_block_forward.8} parent=0 // pred_check_branch
    %409 = sbr.rel (0) target = $region13
  $region12: #{res_block_forward.8} parent=0 // pred_region
    _
  $region13: #{res_block_forward.8} parent=0 // pred_fallthru
    _
  // Predicated region
  $region14: #{res_block_forward.8} parent=0 // pred_check
    _
  $region15: #{res_block_forward.8} parent=0 // pred_check_branch
    %411 = sbr.rel (0) target = $region17
  $region16: #{res_block_forward.8} parent=0 // pred_region
    _
  $region17: #{res_block_forward.8} parent=0 // pred_fallthru
    _
  // Predicated region
  $region18: #{res_block_forward.8} parent=0 // pred_check
    _
  $region19: #{res_block_forward.8} parent=0 // pred_check_branch
    %413 = sbr.rel (0) target = $region21
  $region20: #{res_block_forward.8} parent=0 // pred_region
    _
  $region21: #{res_block_forward.8} parent=0 // pred_fallthru
    _
  // Predicated region
  $region22: #{res_block_forward.8} parent=0 // pred_check
    _
  $region23: #{res_block_forward.8} parent=0 // pred_check_branch
    %415 = sbr.rel (0) target = $region25
  $region24: #{res_block_forward.8} parent=0 // pred_region
    _
  $region25: #{res_block_forward.8} parent=0 // pred_fallthru
    _
  // Predicated region
  $region26: #{res_block_forward.8} parent=0 // pred_check
    _
  $region27: #{res_block_forward.8} parent=0 // pred_check_branch
    %417 = sbr.rel (0) target = $region29
  $region28: #{res_block_forward.8} parent=0 // pred_region
    _
  $region29: #{res_block_forward.8} parent=0 // pred_fallthru
    _
  // Predicated region
  $region30: #{res_block_forward.8} parent=0 // pred_check
    _
  $region31: #{res_block_forward.8} parent=0 // pred_check_branch
    %419 = sbr.rel (0) target = $region33
  $region32: #{res_block_forward.8} parent=0 // pred_region
    _
  $region33: #{res_block_forward.8} parent=0 // pred_fallthru
    _

</llo_original>
